<compile_context>
chip_gen: v6e
topology: v6e:2x2x1
jax: 0.10.0
libtpu: 0.0.40
codegen_flags: <defaults>
</compile_context>

<pallas_src>
import functools

import jax
import jax.numpy as jnp
from jax.experimental import pallas as pl
from jax.experimental.pallas import tpu as pltpu


# ----------------------------------------------------------------------------
# Pallas kernel: 3x3 same-padding conv, all batches in one invocation.
#   x_ref : (B, Cin, H*W + 2P)  flattened-spatial input, zero margin of P=W+1
#   w_ref : (9*Cin, Cout, 1)    weight columns, row r = (kh*3+kw)*Cin + ci
#   b_ref : (Cout, 1)           bias column
#   o_ref : (B, Cout, H*W)      lane-dense output
# ----------------------------------------------------------------------------
def _conv3x3_kernel(x_ref, w_ref, b_ref, o_ref, *, B, Cin, Cout, H, W, P):
    HW = H * W
    # w-coordinate of every flattened pixel (lane axis) -> horizontal edge masks.
    lane = jax.lax.broadcasted_iota(jnp.int32, (1, HW), 1)
    w_pos = lane % W
    edge_mask = {-1: w_pos >= 1, 0: None, 1: w_pos <= W - 2}

    for b in range(B):  # B is tiny & static -> unrolled; no grid-step overhead
        acc = jnp.zeros((Cout, HW), jnp.float32)  # lane-dense accumulator (8, 256)
        for kh in range(3):
            for kw in range(3):
                dh, dw = kh - 1, kw - 1
                start = P + dh * W + dw                    # static lane offset
                tap = x_ref[b, :, pl.ds(start, HW)]        # (Cin, HW) shifted window
                if edge_mask[dw] is not None:              # kill W-wraparound columns
                    tap = jnp.where(edge_mask[dw], tap, 0.0)
                t = kh * 3 + kw
                for ci in range(Cin):
                    wt = w_ref[t * Cin + ci]               # (Cout, 1) weight column
                    # VPU broadcast-FMA: (Cout,1) * (1,HW) -> (Cout, HW)
                    acc = acc + wt * tap[ci:ci + 1, :]
        acc = acc + b_ref[...]                             # bias broadcast over lanes
        o_ref[b] = acc.astype(o_ref.dtype)                 # lane-dense store


def conv3x3_pallas(x_nchw, w_cols, bias_col):
    """3x3, stride-1, padding-1 convolution via a Pallas TPU kernel.

    x_nchw:   (B, Cin, H, W) float32   (PyTorch NCHW layout, no transpose needed)
    w_cols:   (9*Cin, Cout, 1) float32 (row r = (kh*3+kw)*Cin + ci)
    bias_col: (Cout, 1) float32
    returns:  (B, Cout, H, W) float32
    """
    B, Cin, H, W = x_nchw.shape
    Cout = w_cols.shape[1]
    HW = H * W
    P = W + 1  # flat-axis zero margin so every tap offset stays in range

    # Free reshape (no transpose) + tiny zero-extension of the flat spatial axis.
    x_ext = jnp.pad(x_nchw.reshape(B, Cin, HW), ((0, 0), (0, 0), (P, P)))

    kernel = functools.partial(
        _conv3x3_kernel, B=B, Cin=Cin, Cout=Cout, H=H, W=W, P=P)

    out = pl.pallas_call(
        kernel,
        out_shape=jax.ShapeDtypeStruct((B, Cout, HW), x_nchw.dtype),
        # No grid: the whole (few-KB) problem lives in VMEM for one invocation.
        in_specs=[
            pl.BlockSpec(memory_space=pltpu.MemorySpace.VMEM),
            pl.BlockSpec(memory_space=pltpu.MemorySpace.VMEM),
            pl.BlockSpec(memory_space=pltpu.MemorySpace.VMEM),
        ],
        out_specs=pl.BlockSpec(memory_space=pltpu.MemorySpace.VMEM),
    )(x_ext, w_cols, bias_col)

    return out.reshape(B, Cout, H, W)  # free reshape back to NCHW


# ----------------------------------------------------------------------------
# The wrapped sub-module (representative of `self.module` in the PyTorch code):
# Conv2d(4, 8, kernel_size=3, padding=1, bias=True), NCHW in / NCHW out.
# ----------------------------------------------------------------------------
class Conv2dModule:
    def __init__(self, in_ch, out_ch, key):
        k_w, k_b = jax.random.split(key)
        fan_in = in_ch * 3 * 3
        bound = 1.0 / jnp.sqrt(fan_in)
        # PyTorch-style uniform init, OIHW.
        self.weight_oihw = jax.random.uniform(
            k_w, (out_ch, in_ch, 3, 3), jnp.float32, -bound, bound)
        self.bias = jax.random.uniform(k_b, (out_ch,), jnp.float32, -bound, bound)
        # Kernel-friendly layouts, precomputed once:
        #   w_cols[(kh*3+kw)*Cin + ci, o, 0] = weight_oihw[o, ci, kh, kw]
        w_t = jnp.transpose(self.weight_oihw, (2, 3, 1, 0))       # (kh, kw, ci, o)
        self.w_cols = w_t.reshape(9 * in_ch, out_ch)[:, :, None]  # (9*Cin, Cout, 1)
        self.bias_col = self.bias.reshape(out_ch, 1)

    def __call__(self, x_nchw):
        return conv3x3_pallas(x_nchw, self.w_cols, self.bias_col)


# ----------------------------------------------------------------------------
# JAX port of TorchScriptTraceWrapper: trace (jit) the wrapped module on the
# first call, cache the traced version, and forward *args thereafter.
# ----------------------------------------------------------------------------
class TraceWrapper:
    def __init__(self, module):
        self.module = module
        self.module_traced = None  # analogue of the torch.jit.trace cache

    def __call__(self, *args):
        args_list = []
        for arg in args:
            args_list.append(arg)
        if self.module_traced is None:
            # jax.jit traces lazily on first invocation, like torch.jit.trace
            self.module_traced = jax.jit(lambda *a: self.module(*a))
        return self.module_traced(*args_list)


if __name__ == "__main__":
    key = jax.random.PRNGKey(0)
    k_mod, k_x = jax.random.split(key)

    B, Cin, H, W = 2, 4, 16, 16
    Cout = 8

    module = Conv2dModule(Cin, Cout, k_mod)
    wrapper = TraceWrapper(module)

    x = jax.random.normal(k_x, (B, Cin, H, W), jnp.float32)  # NCHW, like PyTorch

    y = wrapper(x)                              # first call: traces + runs Pallas kernel
    y = jax.block_until_ready(y)
    y2 = jax.block_until_ready(wrapper(x))      # second call: reuses the cached trace

    # Reference check against XLA's conv (same semantics as nn.Conv2d pad=1).
    ref = jax.lax.conv_general_dilated(
        x, module.weight_oihw,
        window_strides=(1, 1),
        padding=((1, 1), (1, 1)),
        dimension_numbers=("NCHW", "OIHW", "NCHW"),
    ) + module.bias.reshape(1, Cout, 1, 1)

    assert y.shape == (B, Cout, H, W)
    assert jnp.allclose(y, ref, atol=1e-4, rtol=1e-4)
    assert jnp.allclose(y, y2)

    print("KERNEL_OK")
</pallas_src>

<mosaic_0001>
module attributes {stable_mosaic.version = 11 : i64} {
  func.func @_conv3x3_kernel(%arg0: memref<2x4x290xf32, #tpu.memory_space<vmem>>, %arg1: memref<36x8x1xf32, #tpu.memory_space<vmem>>, %arg2: memref<8x1xf32, #tpu.memory_space<vmem>>, %arg3: memref<2x8x256xf32, #tpu.memory_space<vmem>>) attributes {dimension_semantics = [], scalar_prefetch = 0 : i64, scratch_operands = 0 : i64, tpu.core_type = #tpu.core_type<tc>} {
    %0 = tpu.iota {dimensions = array<i32: 1>} : vector<1x256xi32>
    %c16_i32 = arith.constant 16 : i32
    %c0_i32 = arith.constant 0 : i32
    %1 = arith.cmpi eq, %c16_i32, %c0_i32 : i32
    %c1_i32 = arith.constant 1 : i32
    %2 = arith.select %1, %c1_i32, %c16_i32 : i32
    %3 = vector.broadcast %2 : i32 to vector<1x256xi32>
    %4 = arith.remsi %0, %3 : vector<1x256xi32>
    %c0_i32_0 = arith.constant 0 : i32
    %5 = vector.broadcast %c0_i32_0 : i32 to vector<1x256xi32>
    %6 = arith.cmpi ne, %4, %5 : vector<1x256xi32>
    %c0_i32_1 = arith.constant 0 : i32
    %7 = vector.broadcast %c0_i32_1 : i32 to vector<1x256xi32>
    %8 = arith.cmpi slt, %4, %7 : vector<1x256xi32>
    %c0_i32_2 = arith.constant 0 : i32
    %9 = arith.cmpi slt, %2, %c0_i32_2 : i32
    %10 = vector.broadcast %9 : i1 to vector<1x256xi1>
    %11 = vector.broadcast %10 : vector<1x256xi1> to vector<1x256xi1>
    %12 = arith.xori %8, %11 : vector<1x256xi1>
    %13 = arith.andi %12, %6 : vector<1x256xi1>
    %14 = vector.broadcast %2 : i32 to vector<1x256xi32>
    %15 = arith.addi %4, %14 : vector<1x256xi32>
    %16 = arith.select %13, %15, %4 : vector<1x256xi1>, vector<1x256xi32>
    %c1_i32_3 = arith.constant 1 : i32
    %17 = vector.broadcast %c1_i32_3 : i32 to vector<1x256xi32>
    %18 = arith.cmpi sge, %16, %17 : vector<1x256xi32>
    %c14_i32 = arith.constant 14 : i32
    %19 = vector.broadcast %c14_i32 : i32 to vector<1x256xi32>
    %20 = arith.cmpi sle, %16, %19 : vector<1x256xi32>
    %cst = arith.constant 0.000000e+00 : f32
    %21 = vector.broadcast %cst : f32 to vector<8x256xf32>
    %c0 = arith.constant 0 : index
    %c0_4 = arith.constant 0 : index
    %c0_5 = arith.constant 0 : index
    %22 = vector.load %arg0[%c0, %c0_4, %c0_5] : memref<2x4x290xf32, #tpu.memory_space<vmem>>, vector<1x4x256xf32>
    %23 = vector.shape_cast %22 : vector<1x4x256xf32> to vector<4x256xf32>
    %cst_6 = arith.constant 0.000000e+00 : f32
    %24 = vector.shape_cast %18 : vector<1x256xi1> to vector<1x256xi1>
    %25 = vector.broadcast %24 : vector<1x256xi1> to vector<4x256xi1>
    %26 = vector.broadcast %cst_6 : f32 to vector<4x256xf32>
    %27 = arith.select %25, %23, %26 : vector<4x256xi1>, vector<4x256xf32>
    %c0_7 = arith.constant 0 : index
    %c0_8 = arith.constant 0 : index
    %c0_9 = arith.constant 0 : index
    %28 = vector.load %arg1[%c0_7, %c0_8, %c0_9] : memref<36x8x1xf32, #tpu.memory_space<vmem>>, vector<1x8x1xf32>
    %29 = vector.shape_cast %28 : vector<1x8x1xf32> to vector<8x1xf32>
    %30 = vector.extract_strided_slice %27 {offsets = [0, 0], sizes = [1, 256], strides = [1, 1]} : vector<4x256xf32> to vector<1x256xf32>
    %31 = vector.broadcast %29 : vector<8x1xf32> to vector<8x256xf32>
    %32 = vector.broadcast %30 : vector<1x256xf32> to vector<8x256xf32>
    %33 = arith.mulf %31, %32 : vector<8x256xf32>
    %34 = arith.addf %21, %33 : vector<8x256xf32>
    %c1 = arith.constant 1 : index
    %c0_10 = arith.constant 0 : index
    %c0_11 = arith.constant 0 : index
    %35 = vector.load %arg1[%c1, %c0_10, %c0_11] : memref<36x8x1xf32, #tpu.memory_space<vmem>>, vector<1x8x1xf32>
    %36 = vector.shape_cast %35 : vector<1x8x1xf32> to vector<8x1xf32>
    %37 = vector.extract_strided_slice %27 {offsets = [1, 0], sizes = [1, 256], strides = [1, 1]} : vector<4x256xf32> to vector<1x256xf32>
    %38 = vector.broadcast %36 : vector<8x1xf32> to vector<8x256xf32>
    %39 = vector.broadcast %37 : vector<1x256xf32> to vector<8x256xf32>
    %40 = arith.mulf %38, %39 : vector<8x256xf32>
    %41 = arith.addf %34, %40 : vector<8x256xf32>
    %c2 = arith.constant 2 : index
    %c0_12 = arith.constant 0 : index
    %c0_13 = arith.constant 0 : index
    %42 = vector.load %arg1[%c2, %c0_12, %c0_13] : memref<36x8x1xf32, #tpu.memory_space<vmem>>, vector<1x8x1xf32>
    %43 = vector.shape_cast %42 : vector<1x8x1xf32> to vector<8x1xf32>
    %44 = vector.extract_strided_slice %27 {offsets = [2, 0], sizes = [1, 256], strides = [1, 1]} : vector<4x256xf32> to vector<1x256xf32>
    %45 = vector.broadcast %43 : vector<8x1xf32> to vector<8x256xf32>
    %46 = vector.broadcast %44 : vector<1x256xf32> to vector<8x256xf32>
    %47 = arith.mulf %45, %46 : vector<8x256xf32>
    %48 = arith.addf %41, %47 : vector<8x256xf32>
    %c3 = arith.constant 3 : index
    %c0_14 = arith.constant 0 : index
    %c0_15 = arith.constant 0 : index
    %49 = vector.load %arg1[%c3, %c0_14, %c0_15] : memref<36x8x1xf32, #tpu.memory_space<vmem>>, vector<1x8x1xf32>
    %50 = vector.shape_cast %49 : vector<1x8x1xf32> to vector<8x1xf32>
    %51 = vector.extract_strided_slice %27 {offsets = [3, 0], sizes = [1, 256], strides = [1, 1]} : vector<4x256xf32> to vector<1x256xf32>
    %52 = vector.broadcast %50 : vector<8x1xf32> to vector<8x256xf32>
    %53 = vector.broadcast %51 : vector<1x256xf32> to vector<8x256xf32>
    %54 = arith.mulf %52, %53 : vector<8x256xf32>
    %55 = arith.addf %48, %54 : vector<8x256xf32>
    %c0_16 = arith.constant 0 : index
    %c0_17 = arith.constant 0 : index
    %c1_18 = arith.constant 1 : index
    %56 = vector.load %arg0[%c0_16, %c0_17, %c1_18] : memref<2x4x290xf32, #tpu.memory_space<vmem>>, vector<1x4x256xf32>
    %57 = vector.shape_cast %56 : vector<1x4x256xf32> to vector<4x256xf32>
    %c4 = arith.constant 4 : index
    %c0_19 = arith.constant 0 : index
    %c0_20 = arith.constant 0 : index
    %58 = vector.load %arg1[%c4, %c0_19, %c0_20] : memref<36x8x1xf32, #tpu.memory_space<vmem>>, vector<1x8x1xf32>
    %59 = vector.shape_cast %58 : vector<1x8x1xf32> to vector<8x1xf32>
    %60 = vector.extract_strided_slice %57 {offsets = [0, 0], sizes = [1, 256], strides = [1, 1]} : vector<4x256xf32> to vector<1x256xf32>
    %61 = vector.broadcast %59 : vector<8x1xf32> to vector<8x256xf32>
    %62 = vector.broadcast %60 : vector<1x256xf32> to vector<8x256xf32>
    %63 = arith.mulf %61, %62 : vector<8x256xf32>
    %64 = arith.addf %55, %63 : vector<8x256xf32>
    %c5 = arith.constant 5 : index
    %c0_21 = arith.constant 0 : index
    %c0_22 = arith.constant 0 : index
    %65 = vector.load %arg1[%c5, %c0_21, %c0_22] : memref<36x8x1xf32, #tpu.memory_space<vmem>>, vector<1x8x1xf32>
    %66 = vector.shape_cast %65 : vector<1x8x1xf32> to vector<8x1xf32>
    %67 = vector.extract_strided_slice %57 {offsets = [1, 0], sizes = [1, 256], strides = [1, 1]} : vector<4x256xf32> to vector<1x256xf32>
    %68 = vector.broadcast %66 : vector<8x1xf32> to vector<8x256xf32>
    %69 = vector.broadcast %67 : vector<1x256xf32> to vector<8x256xf32>
    %70 = arith.mulf %68, %69 : vector<8x256xf32>
    %71 = arith.addf %64, %70 : vector<8x256xf32>
    %c6 = arith.constant 6 : index
    %c0_23 = arith.constant 0 : index
    %c0_24 = arith.constant 0 : index
    %72 = vector.load %arg1[%c6, %c0_23, %c0_24] : memref<36x8x1xf32, #tpu.memory_space<vmem>>, vector<1x8x1xf32>
    %73 = vector.shape_cast %72 : vector<1x8x1xf32> to vector<8x1xf32>
    %74 = vector.extract_strided_slice %57 {offsets = [2, 0], sizes = [1, 256], strides = [1, 1]} : vector<4x256xf32> to vector<1x256xf32>
    %75 = vector.broadcast %73 : vector<8x1xf32> to vector<8x256xf32>
    %76 = vector.broadcast %74 : vector<1x256xf32> to vector<8x256xf32>
    %77 = arith.mulf %75, %76 : vector<8x256xf32>
    %78 = arith.addf %71, %77 : vector<8x256xf32>
    %c7 = arith.constant 7 : index
    %c0_25 = arith.constant 0 : index
    %c0_26 = arith.constant 0 : index
    %79 = vector.load %arg1[%c7, %c0_25, %c0_26] : memref<36x8x1xf32, #tpu.memory_space<vmem>>, vector<1x8x1xf32>
    %80 = vector.shape_cast %79 : vector<1x8x1xf32> to vector<8x1xf32>
    %81 = vector.extract_strided_slice %57 {offsets = [3, 0], sizes = [1, 256], strides = [1, 1]} : vector<4x256xf32> to vector<1x256xf32>
    %82 = vector.broadcast %80 : vector<8x1xf32> to vector<8x256xf32>
    %83 = vector.broadcast %81 : vector<1x256xf32> to vector<8x256xf32>
    %84 = arith.mulf %82, %83 : vector<8x256xf32>
    %85 = arith.addf %78, %84 : vector<8x256xf32>
    %c0_27 = arith.constant 0 : index
    %c0_28 = arith.constant 0 : index
    %c2_29 = arith.constant 2 : index
    %86 = vector.load %arg0[%c0_27, %c0_28, %c2_29] : memref<2x4x290xf32, #tpu.memory_space<vmem>>, vector<1x4x256xf32>
    %87 = vector.shape_cast %86 : vector<1x4x256xf32> to vector<4x256xf32>
    %cst_30 = arith.constant 0.000000e+00 : f32
    %88 = vector.shape_cast %20 : vector<1x256xi1> to vector<1x256xi1>
    %89 = vector.broadcast %88 : vector<1x256xi1> to vector<4x256xi1>
    %90 = vector.broadcast %cst_30 : f32 to vector<4x256xf32>
    %91 = arith.select %89, %87, %90 : vector<4x256xi1>, vector<4x256xf32>
    %c8 = arith.constant 8 : index
    %c0_31 = arith.constant 0 : index
    %c0_32 = arith.constant 0 : index
    %92 = vector.load %arg1[%c8, %c0_31, %c0_32] : memref<36x8x1xf32, #tpu.memory_space<vmem>>, vector<1x8x1xf32>
    %93 = vector.shape_cast %92 : vector<1x8x1xf32> to vector<8x1xf32>
    %94 = vector.extract_strided_slice %91 {offsets = [0, 0], sizes = [1, 256], strides = [1, 1]} : vector<4x256xf32> to vector<1x256xf32>
    %95 = vector.broadcast %93 : vector<8x1xf32> to vector<8x256xf32>
    %96 = vector.broadcast %94 : vector<1x256xf32> to vector<8x256xf32>
    %97 = arith.mulf %95, %96 : vector<8x256xf32>
    %98 = arith.addf %85, %97 : vector<8x256xf32>
    %c9 = arith.constant 9 : index
    %c0_33 = arith.constant 0 : index
    %c0_34 = arith.constant 0 : index
    %99 = vector.load %arg1[%c9, %c0_33, %c0_34] : memref<36x8x1xf32, #tpu.memory_space<vmem>>, vector<1x8x1xf32>
    %100 = vector.shape_cast %99 : vector<1x8x1xf32> to vector<8x1xf32>
    %101 = vector.extract_strided_slice %91 {offsets = [1, 0], sizes = [1, 256], strides = [1, 1]} : vector<4x256xf32> to vector<1x256xf32>
    %102 = vector.broadcast %100 : vector<8x1xf32> to vector<8x256xf32>
    %103 = vector.broadcast %101 : vector<1x256xf32> to vector<8x256xf32>
    %104 = arith.mulf %102, %103 : vector<8x256xf32>
    %105 = arith.addf %98, %104 : vector<8x256xf32>
    %c10 = arith.constant 10 : index
    %c0_35 = arith.constant 0 : index
    %c0_36 = arith.constant 0 : index
    %106 = vector.load %arg1[%c10, %c0_35, %c0_36] : memref<36x8x1xf32, #tpu.memory_space<vmem>>, vector<1x8x1xf32>
    %107 = vector.shape_cast %106 : vector<1x8x1xf32> to vector<8x1xf32>
    %108 = vector.extract_strided_slice %91 {offsets = [2, 0], sizes = [1, 256], strides = [1, 1]} : vector<4x256xf32> to vector<1x256xf32>
    %109 = vector.broadcast %107 : vector<8x1xf32> to vector<8x256xf32>
    %110 = vector.broadcast %108 : vector<1x256xf32> to vector<8x256xf32>
    %111 = arith.mulf %109, %110 : vector<8x256xf32>
    %112 = arith.addf %105, %111 : vector<8x256xf32>
    %c11 = arith.constant 11 : index
    %c0_37 = arith.constant 0 : index
    %c0_38 = arith.constant 0 : index
    %113 = vector.load %arg1[%c11, %c0_37, %c0_38] : memref<36x8x1xf32, #tpu.memory_space<vmem>>, vector<1x8x1xf32>
    %114 = vector.shape_cast %113 : vector<1x8x1xf32> to vector<8x1xf32>
    %115 = vector.extract_strided_slice %91 {offsets = [3, 0], sizes = [1, 256], strides = [1, 1]} : vector<4x256xf32> to vector<1x256xf32>
    %116 = vector.broadcast %114 : vector<8x1xf32> to vector<8x256xf32>
    %117 = vector.broadcast %115 : vector<1x256xf32> to vector<8x256xf32>
    %118 = arith.mulf %116, %117 : vector<8x256xf32>
    %119 = arith.addf %112, %118 : vector<8x256xf32>
    %c0_39 = arith.constant 0 : index
    %c0_40 = arith.constant 0 : index
    %c16 = arith.constant 16 : index
    %120 = vector.load %arg0[%c0_39, %c0_40, %c16] : memref<2x4x290xf32, #tpu.memory_space<vmem>>, vector<1x4x256xf32>
    %121 = vector.shape_cast %120 : vector<1x4x256xf32> to vector<4x256xf32>
    %cst_41 = arith.constant 0.000000e+00 : f32
    %122 = vector.shape_cast %18 : vector<1x256xi1> to vector<1x256xi1>
    %123 = vector.broadcast %122 : vector<1x256xi1> to vector<4x256xi1>
    %124 = vector.broadcast %cst_41 : f32 to vector<4x256xf32>
    %125 = arith.select %123, %121, %124 : vector<4x256xi1>, vector<4x256xf32>
    %c12 = arith.constant 12 : index
    %c0_42 = arith.constant 0 : index
    %c0_43 = arith.constant 0 : index
    %126 = vector.load %arg1[%c12, %c0_42, %c0_43] : memref<36x8x1xf32, #tpu.memory_space<vmem>>, vector<1x8x1xf32>
    %127 = vector.shape_cast %126 : vector<1x8x1xf32> to vector<8x1xf32>
    %128 = vector.extract_strided_slice %125 {offsets = [0, 0], sizes = [1, 256], strides = [1, 1]} : vector<4x256xf32> to vector<1x256xf32>
    %129 = vector.broadcast %127 : vector<8x1xf32> to vector<8x256xf32>
    %130 = vector.broadcast %128 : vector<1x256xf32> to vector<8x256xf32>
    %131 = arith.mulf %129, %130 : vector<8x256xf32>
    %132 = arith.addf %119, %131 : vector<8x256xf32>
    %c13 = arith.constant 13 : index
    %c0_44 = arith.constant 0 : index
    %c0_45 = arith.constant 0 : index
    %133 = vector.load %arg1[%c13, %c0_44, %c0_45] : memref<36x8x1xf32, #tpu.memory_space<vmem>>, vector<1x8x1xf32>
    %134 = vector.shape_cast %133 : vector<1x8x1xf32> to vector<8x1xf32>
    %135 = vector.extract_strided_slice %125 {offsets = [1, 0], sizes = [1, 256], strides = [1, 1]} : vector<4x256xf32> to vector<1x256xf32>
    %136 = vector.broadcast %134 : vector<8x1xf32> to vector<8x256xf32>
    %137 = vector.broadcast %135 : vector<1x256xf32> to vector<8x256xf32>
    %138 = arith.mulf %136, %137 : vector<8x256xf32>
    %139 = arith.addf %132, %138 : vector<8x256xf32>
    %c14 = arith.constant 14 : index
    %c0_46 = arith.constant 0 : index
    %c0_47 = arith.constant 0 : index
    %140 = vector.load %arg1[%c14, %c0_46, %c0_47] : memref<36x8x1xf32, #tpu.memory_space<vmem>>, vector<1x8x1xf32>
    %141 = vector.shape_cast %140 : vector<1x8x1xf32> to vector<8x1xf32>
    %142 = vector.extract_strided_slice %125 {offsets = [2, 0], sizes = [1, 256], strides = [1, 1]} : vector<4x256xf32> to vector<1x256xf32>
    %143 = vector.broadcast %141 : vector<8x1xf32> to vector<8x256xf32>
    %144 = vector.broadcast %142 : vector<1x256xf32> to vector<8x256xf32>
    %145 = arith.mulf %143, %144 : vector<8x256xf32>
    %146 = arith.addf %139, %145 : vector<8x256xf32>
    %c15 = arith.constant 15 : index
    %c0_48 = arith.constant 0 : index
    %c0_49 = arith.constant 0 : index
    %147 = vector.load %arg1[%c15, %c0_48, %c0_49] : memref<36x8x1xf32, #tpu.memory_space<vmem>>, vector<1x8x1xf32>
    %148 = vector.shape_cast %147 : vector<1x8x1xf32> to vector<8x1xf32>
    %149 = vector.extract_strided_slice %125 {offsets = [3, 0], sizes = [1, 256], strides = [1, 1]} : vector<4x256xf32> to vector<1x256xf32>
    %150 = vector.broadcast %148 : vector<8x1xf32> to vector<8x256xf32>
    %151 = vector.broadcast %149 : vector<1x256xf32> to vector<8x256xf32>
    %152 = arith.mulf %150, %151 : vector<8x256xf32>
    %153 = arith.addf %146, %152 : vector<8x256xf32>
    %c0_50 = arith.constant 0 : index
    %c0_51 = arith.constant 0 : index
    %c17 = arith.constant 17 : index
    %154 = vector.load %arg0[%c0_50, %c0_51, %c17] : memref<2x4x290xf32, #tpu.memory_space<vmem>>, vector<1x4x256xf32>
    %155 = vector.shape_cast %154 : vector<1x4x256xf32> to vector<4x256xf32>
    %c16_52 = arith.constant 16 : index
    %c0_53 = arith.constant 0 : index
    %c0_54 = arith.constant 0 : index
    %156 = vector.load %arg1[%c16_52, %c0_53, %c0_54] : memref<36x8x1xf32, #tpu.memory_space<vmem>>, vector<1x8x1xf32>
    %157 = vector.shape_cast %156 : vector<1x8x1xf32> to vector<8x1xf32>
    %158 = vector.extract_strided_slice %155 {offsets = [0, 0], sizes = [1, 256], strides = [1, 1]} : vector<4x256xf32> to vector<1x256xf32>
    %159 = vector.broadcast %157 : vector<8x1xf32> to vector<8x256xf32>
    %160 = vector.broadcast %158 : vector<1x256xf32> to vector<8x256xf32>
    %161 = arith.mulf %159, %160 : vector<8x256xf32>
    %162 = arith.addf %153, %161 : vector<8x256xf32>
    %c17_55 = arith.constant 17 : index
    %c0_56 = arith.constant 0 : index
    %c0_57 = arith.constant 0 : index
    %163 = vector.load %arg1[%c17_55, %c0_56, %c0_57] : memref<36x8x1xf32, #tpu.memory_space<vmem>>, vector<1x8x1xf32>
    %164 = vector.shape_cast %163 : vector<1x8x1xf32> to vector<8x1xf32>
    %165 = vector.extract_strided_slice %155 {offsets = [1, 0], sizes = [1, 256], strides = [1, 1]} : vector<4x256xf32> to vector<1x256xf32>
    %166 = vector.broadcast %164 : vector<8x1xf32> to vector<8x256xf32>
    %167 = vector.broadcast %165 : vector<1x256xf32> to vector<8x256xf32>
    %168 = arith.mulf %166, %167 : vector<8x256xf32>
    %169 = arith.addf %162, %168 : vector<8x256xf32>
    %c18 = arith.constant 18 : index
    %c0_58 = arith.constant 0 : index
    %c0_59 = arith.constant 0 : index
    %170 = vector.load %arg1[%c18, %c0_58, %c0_59] : memref<36x8x1xf32, #tpu.memory_space<vmem>>, vector<1x8x1xf32>
    %171 = vector.shape_cast %170 : vector<1x8x1xf32> to vector<8x1xf32>
    %172 = vector.extract_strided_slice %155 {offsets = [2, 0], sizes = [1, 256], strides = [1, 1]} : vector<4x256xf32> to vector<1x256xf32>
    %173 = vector.broadcast %171 : vector<8x1xf32> to vector<8x256xf32>
    %174 = vector.broadcast %172 : vector<1x256xf32> to vector<8x256xf32>
    %175 = arith.mulf %173, %174 : vector<8x256xf32>
    %176 = arith.addf %169, %175 : vector<8x256xf32>
    %c19 = arith.constant 19 : index
    %c0_60 = arith.constant 0 : index
    %c0_61 = arith.constant 0 : index
    %177 = vector.load %arg1[%c19, %c0_60, %c0_61] : memref<36x8x1xf32, #tpu.memory_space<vmem>>, vector<1x8x1xf32>
    %178 = vector.shape_cast %177 : vector<1x8x1xf32> to vector<8x1xf32>
    %179 = vector.extract_strided_slice %155 {offsets = [3, 0], sizes = [1, 256], strides = [1, 1]} : vector<4x256xf32> to vector<1x256xf32>
    %180 = vector.broadcast %178 : vector<8x1xf32> to vector<8x256xf32>
    %181 = vector.broadcast %179 : vector<1x256xf32> to vector<8x256xf32>
    %182 = arith.mulf %180, %181 : vector<8x256xf32>
    %183 = arith.addf %176, %182 : vector<8x256xf32>
    %c0_62 = arith.constant 0 : index
    %c0_63 = arith.constant 0 : index
    %c18_64 = arith.constant 18 : index
    %184 = vector.load %arg0[%c0_62, %c0_63, %c18_64] : memref<2x4x290xf32, #tpu.memory_space<vmem>>, vector<1x4x256xf32>
    %185 = vector.shape_cast %184 : vector<1x4x256xf32> to vector<4x256xf32>
    %cst_65 = arith.constant 0.000000e+00 : f32
    %186 = vector.shape_cast %20 : vector<1x256xi1> to vector<1x256xi1>
    %187 = vector.broadcast %186 : vector<1x256xi1> to vector<4x256xi1>
    %188 = vector.broadcast %cst_65 : f32 to vector<4x256xf32>
    %189 = arith.select %187, %185, %188 : vector<4x256xi1>, vector<4x256xf32>
    %c20 = arith.constant 20 : index
    %c0_66 = arith.constant 0 : index
    %c0_67 = arith.constant 0 : index
    %190 = vector.load %arg1[%c20, %c0_66, %c0_67] : memref<36x8x1xf32, #tpu.memory_space<vmem>>, vector<1x8x1xf32>
    %191 = vector.shape_cast %190 : vector<1x8x1xf32> to vector<8x1xf32>
    %192 = vector.extract_strided_slice %189 {offsets = [0, 0], sizes = [1, 256], strides = [1, 1]} : vector<4x256xf32> to vector<1x256xf32>
    %193 = vector.broadcast %191 : vector<8x1xf32> to vector<8x256xf32>
    %194 = vector.broadcast %192 : vector<1x256xf32> to vector<8x256xf32>
    %195 = arith.mulf %193, %194 : vector<8x256xf32>
    %196 = arith.addf %183, %195 : vector<8x256xf32>
    %c21 = arith.constant 21 : index
    %c0_68 = arith.constant 0 : index
    %c0_69 = arith.constant 0 : index
    %197 = vector.load %arg1[%c21, %c0_68, %c0_69] : memref<36x8x1xf32, #tpu.memory_space<vmem>>, vector<1x8x1xf32>
    %198 = vector.shape_cast %197 : vector<1x8x1xf32> to vector<8x1xf32>
    %199 = vector.extract_strided_slice %189 {offsets = [1, 0], sizes = [1, 256], strides = [1, 1]} : vector<4x256xf32> to vector<1x256xf32>
    %200 = vector.broadcast %198 : vector<8x1xf32> to vector<8x256xf32>
    %201 = vector.broadcast %199 : vector<1x256xf32> to vector<8x256xf32>
    %202 = arith.mulf %200, %201 : vector<8x256xf32>
    %203 = arith.addf %196, %202 : vector<8x256xf32>
    %c22 = arith.constant 22 : index
    %c0_70 = arith.constant 0 : index
    %c0_71 = arith.constant 0 : index
    %204 = vector.load %arg1[%c22, %c0_70, %c0_71] : memref<36x8x1xf32, #tpu.memory_space<vmem>>, vector<1x8x1xf32>
    %205 = vector.shape_cast %204 : vector<1x8x1xf32> to vector<8x1xf32>
    %206 = vector.extract_strided_slice %189 {offsets = [2, 0], sizes = [1, 256], strides = [1, 1]} : vector<4x256xf32> to vector<1x256xf32>
    %207 = vector.broadcast %205 : vector<8x1xf32> to vector<8x256xf32>
    %208 = vector.broadcast %206 : vector<1x256xf32> to vector<8x256xf32>
    %209 = arith.mulf %207, %208 : vector<8x256xf32>
    %210 = arith.addf %203, %209 : vector<8x256xf32>
    %c23 = arith.constant 23 : index
    %c0_72 = arith.constant 0 : index
    %c0_73 = arith.constant 0 : index
    %211 = vector.load %arg1[%c23, %c0_72, %c0_73] : memref<36x8x1xf32, #tpu.memory_space<vmem>>, vector<1x8x1xf32>
    %212 = vector.shape_cast %211 : vector<1x8x1xf32> to vector<8x1xf32>
    %213 = vector.extract_strided_slice %189 {offsets = [3, 0], sizes = [1, 256], strides = [1, 1]} : vector<4x256xf32> to vector<1x256xf32>
    %214 = vector.broadcast %212 : vector<8x1xf32> to vector<8x256xf32>
    %215 = vector.broadcast %213 : vector<1x256xf32> to vector<8x256xf32>
    %216 = arith.mulf %214, %215 : vector<8x256xf32>
    %217 = arith.addf %210, %216 : vector<8x256xf32>
    %c0_74 = arith.constant 0 : index
    %c0_75 = arith.constant 0 : index
    %c32 = arith.constant 32 : index
    %218 = vector.load %arg0[%c0_74, %c0_75, %c32] : memref<2x4x290xf32, #tpu.memory_space<vmem>>, vector<1x4x256xf32>
    %219 = vector.shape_cast %218 : vector<1x4x256xf32> to vector<4x256xf32>
    %cst_76 = arith.constant 0.000000e+00 : f32
    %220 = vector.shape_cast %18 : vector<1x256xi1> to vector<1x256xi1>
    %221 = vector.broadcast %220 : vector<1x256xi1> to vector<4x256xi1>
    %222 = vector.broadcast %cst_76 : f32 to vector<4x256xf32>
    %223 = arith.select %221, %219, %222 : vector<4x256xi1>, vector<4x256xf32>
    %c24 = arith.constant 24 : index
    %c0_77 = arith.constant 0 : index
    %c0_78 = arith.constant 0 : index
    %224 = vector.load %arg1[%c24, %c0_77, %c0_78] : memref<36x8x1xf32, #tpu.memory_space<vmem>>, vector<1x8x1xf32>
    %225 = vector.shape_cast %224 : vector<1x8x1xf32> to vector<8x1xf32>
    %226 = vector.extract_strided_slice %223 {offsets = [0, 0], sizes = [1, 256], strides = [1, 1]} : vector<4x256xf32> to vector<1x256xf32>
    %227 = vector.broadcast %225 : vector<8x1xf32> to vector<8x256xf32>
    %228 = vector.broadcast %226 : vector<1x256xf32> to vector<8x256xf32>
    %229 = arith.mulf %227, %228 : vector<8x256xf32>
    %230 = arith.addf %217, %229 : vector<8x256xf32>
    %c25 = arith.constant 25 : index
    %c0_79 = arith.constant 0 : index
    %c0_80 = arith.constant 0 : index
    %231 = vector.load %arg1[%c25, %c0_79, %c0_80] : memref<36x8x1xf32, #tpu.memory_space<vmem>>, vector<1x8x1xf32>
    %232 = vector.shape_cast %231 : vector<1x8x1xf32> to vector<8x1xf32>
    %233 = vector.extract_strided_slice %223 {offsets = [1, 0], sizes = [1, 256], strides = [1, 1]} : vector<4x256xf32> to vector<1x256xf32>
    %234 = vector.broadcast %232 : vector<8x1xf32> to vector<8x256xf32>
    %235 = vector.broadcast %233 : vector<1x256xf32> to vector<8x256xf32>
    %236 = arith.mulf %234, %235 : vector<8x256xf32>
    %237 = arith.addf %230, %236 : vector<8x256xf32>
    %c26 = arith.constant 26 : index
    %c0_81 = arith.constant 0 : index
    %c0_82 = arith.constant 0 : index
    %238 = vector.load %arg1[%c26, %c0_81, %c0_82] : memref<36x8x1xf32, #tpu.memory_space<vmem>>, vector<1x8x1xf32>
    %239 = vector.shape_cast %238 : vector<1x8x1xf32> to vector<8x1xf32>
    %240 = vector.extract_strided_slice %223 {offsets = [2, 0], sizes = [1, 256], strides = [1, 1]} : vector<4x256xf32> to vector<1x256xf32>
    %241 = vector.broadcast %239 : vector<8x1xf32> to vector<8x256xf32>
    %242 = vector.broadcast %240 : vector<1x256xf32> to vector<8x256xf32>
    %243 = arith.mulf %241, %242 : vector<8x256xf32>
    %244 = arith.addf %237, %243 : vector<8x256xf32>
    %c27 = arith.constant 27 : index
    %c0_83 = arith.constant 0 : index
    %c0_84 = arith.constant 0 : index
    %245 = vector.load %arg1[%c27, %c0_83, %c0_84] : memref<36x8x1xf32, #tpu.memory_space<vmem>>, vector<1x8x1xf32>
    %246 = vector.shape_cast %245 : vector<1x8x1xf32> to vector<8x1xf32>
    %247 = vector.extract_strided_slice %223 {offsets = [3, 0], sizes = [1, 256], strides = [1, 1]} : vector<4x256xf32> to vector<1x256xf32>
    %248 = vector.broadcast %246 : vector<8x1xf32> to vector<8x256xf32>
    %249 = vector.broadcast %247 : vector<1x256xf32> to vector<8x256xf32>
    %250 = arith.mulf %248, %249 : vector<8x256xf32>
    %251 = arith.addf %244, %250 : vector<8x256xf32>
    %c0_85 = arith.constant 0 : index
    %c0_86 = arith.constant 0 : index
    %c33 = arith.constant 33 : index
    %252 = vector.load %arg0[%c0_85, %c0_86, %c33] : memref<2x4x290xf32, #tpu.memory_space<vmem>>, vector<1x4x256xf32>
    %253 = vector.shape_cast %252 : vector<1x4x256xf32> to vector<4x256xf32>
    %c28 = arith.constant 28 : index
    %c0_87 = arith.constant 0 : index
    %c0_88 = arith.constant 0 : index
    %254 = vector.load %arg1[%c28, %c0_87, %c0_88] : memref<36x8x1xf32, #tpu.memory_space<vmem>>, vector<1x8x1xf32>
    %255 = vector.shape_cast %254 : vector<1x8x1xf32> to vector<8x1xf32>
    %256 = vector.extract_strided_slice %253 {offsets = [0, 0], sizes = [1, 256], strides = [1, 1]} : vector<4x256xf32> to vector<1x256xf32>
    %257 = vector.broadcast %255 : vector<8x1xf32> to vector<8x256xf32>
    %258 = vector.broadcast %256 : vector<1x256xf32> to vector<8x256xf32>
    %259 = arith.mulf %257, %258 : vector<8x256xf32>
    %260 = arith.addf %251, %259 : vector<8x256xf32>
    %c29 = arith.constant 29 : index
    %c0_89 = arith.constant 0 : index
    %c0_90 = arith.constant 0 : index
    %261 = vector.load %arg1[%c29, %c0_89, %c0_90] : memref<36x8x1xf32, #tpu.memory_space<vmem>>, vector<1x8x1xf32>
    %262 = vector.shape_cast %261 : vector<1x8x1xf32> to vector<8x1xf32>
    %263 = vector.extract_strided_slice %253 {offsets = [1, 0], sizes = [1, 256], strides = [1, 1]} : vector<4x256xf32> to vector<1x256xf32>
    %264 = vector.broadcast %262 : vector<8x1xf32> to vector<8x256xf32>
    %265 = vector.broadcast %263 : vector<1x256xf32> to vector<8x256xf32>
    %266 = arith.mulf %264, %265 : vector<8x256xf32>
    %267 = arith.addf %260, %266 : vector<8x256xf32>
    %c30 = arith.constant 30 : index
    %c0_91 = arith.constant 0 : index
    %c0_92 = arith.constant 0 : index
    %268 = vector.load %arg1[%c30, %c0_91, %c0_92] : memref<36x8x1xf32, #tpu.memory_space<vmem>>, vector<1x8x1xf32>
    %269 = vector.shape_cast %268 : vector<1x8x1xf32> to vector<8x1xf32>
    %270 = vector.extract_strided_slice %253 {offsets = [2, 0], sizes = [1, 256], strides = [1, 1]} : vector<4x256xf32> to vector<1x256xf32>
    %271 = vector.broadcast %269 : vector<8x1xf32> to vector<8x256xf32>
    %272 = vector.broadcast %270 : vector<1x256xf32> to vector<8x256xf32>
    %273 = arith.mulf %271, %272 : vector<8x256xf32>
    %274 = arith.addf %267, %273 : vector<8x256xf32>
    %c31 = arith.constant 31 : index
    %c0_93 = arith.constant 0 : index
    %c0_94 = arith.constant 0 : index
    %275 = vector.load %arg1[%c31, %c0_93, %c0_94] : memref<36x8x1xf32, #tpu.memory_space<vmem>>, vector<1x8x1xf32>
    %276 = vector.shape_cast %275 : vector<1x8x1xf32> to vector<8x1xf32>
    %277 = vector.extract_strided_slice %253 {offsets = [3, 0], sizes = [1, 256], strides = [1, 1]} : vector<4x256xf32> to vector<1x256xf32>
    %278 = vector.broadcast %276 : vector<8x1xf32> to vector<8x256xf32>
    %279 = vector.broadcast %277 : vector<1x256xf32> to vector<8x256xf32>
    %280 = arith.mulf %278, %279 : vector<8x256xf32>
    %281 = arith.addf %274, %280 : vector<8x256xf32>
    %c0_95 = arith.constant 0 : index
    %c0_96 = arith.constant 0 : index
    %c34 = arith.constant 34 : index
    %282 = vector.load %arg0[%c0_95, %c0_96, %c34] : memref<2x4x290xf32, #tpu.memory_space<vmem>>, vector<1x4x256xf32>
    %283 = vector.shape_cast %282 : vector<1x4x256xf32> to vector<4x256xf32>
    %cst_97 = arith.constant 0.000000e+00 : f32
    %284 = vector.shape_cast %20 : vector<1x256xi1> to vector<1x256xi1>
    %285 = vector.broadcast %284 : vector<1x256xi1> to vector<4x256xi1>
    %286 = vector.broadcast %cst_97 : f32 to vector<4x256xf32>
    %287 = arith.select %285, %283, %286 : vector<4x256xi1>, vector<4x256xf32>
    %c32_98 = arith.constant 32 : index
    %c0_99 = arith.constant 0 : index
    %c0_100 = arith.constant 0 : index
    %288 = vector.load %arg1[%c32_98, %c0_99, %c0_100] : memref<36x8x1xf32, #tpu.memory_space<vmem>>, vector<1x8x1xf32>
    %289 = vector.shape_cast %288 : vector<1x8x1xf32> to vector<8x1xf32>
    %290 = vector.extract_strided_slice %287 {offsets = [0, 0], sizes = [1, 256], strides = [1, 1]} : vector<4x256xf32> to vector<1x256xf32>
    %291 = vector.broadcast %289 : vector<8x1xf32> to vector<8x256xf32>
    %292 = vector.broadcast %290 : vector<1x256xf32> to vector<8x256xf32>
    %293 = arith.mulf %291, %292 : vector<8x256xf32>
    %294 = arith.addf %281, %293 : vector<8x256xf32>
    %c33_101 = arith.constant 33 : index
    %c0_102 = arith.constant 0 : index
    %c0_103 = arith.constant 0 : index
    %295 = vector.load %arg1[%c33_101, %c0_102, %c0_103] : memref<36x8x1xf32, #tpu.memory_space<vmem>>, vector<1x8x1xf32>
    %296 = vector.shape_cast %295 : vector<1x8x1xf32> to vector<8x1xf32>
    %297 = vector.extract_strided_slice %287 {offsets = [1, 0], sizes = [1, 256], strides = [1, 1]} : vector<4x256xf32> to vector<1x256xf32>
    %298 = vector.broadcast %296 : vector<8x1xf32> to vector<8x256xf32>
    %299 = vector.broadcast %297 : vector<1x256xf32> to vector<8x256xf32>
    %300 = arith.mulf %298, %299 : vector<8x256xf32>
    %301 = arith.addf %294, %300 : vector<8x256xf32>
    %c34_104 = arith.constant 34 : index
    %c0_105 = arith.constant 0 : index
    %c0_106 = arith.constant 0 : index
    %302 = vector.load %arg1[%c34_104, %c0_105, %c0_106] : memref<36x8x1xf32, #tpu.memory_space<vmem>>, vector<1x8x1xf32>
    %303 = vector.shape_cast %302 : vector<1x8x1xf32> to vector<8x1xf32>
    %304 = vector.extract_strided_slice %287 {offsets = [2, 0], sizes = [1, 256], strides = [1, 1]} : vector<4x256xf32> to vector<1x256xf32>
    %305 = vector.broadcast %303 : vector<8x1xf32> to vector<8x256xf32>
    %306 = vector.broadcast %304 : vector<1x256xf32> to vector<8x256xf32>
    %307 = arith.mulf %305, %306 : vector<8x256xf32>
    %308 = arith.addf %301, %307 : vector<8x256xf32>
    %c35 = arith.constant 35 : index
    %c0_107 = arith.constant 0 : index
    %c0_108 = arith.constant 0 : index
    %309 = vector.load %arg1[%c35, %c0_107, %c0_108] : memref<36x8x1xf32, #tpu.memory_space<vmem>>, vector<1x8x1xf32>
    %310 = vector.shape_cast %309 : vector<1x8x1xf32> to vector<8x1xf32>
    %311 = vector.extract_strided_slice %287 {offsets = [3, 0], sizes = [1, 256], strides = [1, 1]} : vector<4x256xf32> to vector<1x256xf32>
    %312 = vector.broadcast %310 : vector<8x1xf32> to vector<8x256xf32>
    %313 = vector.broadcast %311 : vector<1x256xf32> to vector<8x256xf32>
    %314 = arith.mulf %312, %313 : vector<8x256xf32>
    %315 = arith.addf %308, %314 : vector<8x256xf32>
    %c0_109 = arith.constant 0 : index
    %c0_110 = arith.constant 0 : index
    %316 = vector.load %arg2[%c0_109, %c0_110] : memref<8x1xf32, #tpu.memory_space<vmem>>, vector<8x1xf32>
    %317 = vector.broadcast %316 : vector<8x1xf32> to vector<8x256xf32>
    %318 = arith.addf %315, %317 : vector<8x256xf32>
    %c0_111 = arith.constant 0 : index
    %c0_112 = arith.constant 0 : index
    %c0_113 = arith.constant 0 : index
    %319 = vector.load %arg3[%c0_111, %c0_112, %c0_113] : memref<2x8x256xf32, #tpu.memory_space<vmem>>, vector<1x8x256xf32>
    %320 = vector.shape_cast %319 : vector<1x8x256xf32> to vector<8x256xf32>
    %321 = vector.shape_cast %318 : vector<8x256xf32> to vector<1x8x256xf32>
    tpu.vector_store %arg3[%c0_111, %c0_112, %c0_113], %321 {strides = array<i32>} : memref<2x8x256xf32, #tpu.memory_space<vmem>>, vector<1x8x256xf32>,
    %cst_114 = arith.constant 0.000000e+00 : f32
    %322 = vector.broadcast %cst_114 : f32 to vector<8x256xf32>
    %c1_115 = arith.constant 1 : index
    %c0_116 = arith.constant 0 : index
    %c0_117 = arith.constant 0 : index
    %323 = vector.load %arg0[%c1_115, %c0_116, %c0_117] : memref<2x4x290xf32, #tpu.memory_space<vmem>>, vector<1x4x256xf32>
    %324 = vector.shape_cast %323 : vector<1x4x256xf32> to vector<4x256xf32>
    %cst_118 = arith.constant 0.000000e+00 : f32
    %325 = vector.shape_cast %18 : vector<1x256xi1> to vector<1x256xi1>
    %326 = vector.broadcast %325 : vector<1x256xi1> to vector<4x256xi1>
    %327 = vector.broadcast %cst_118 : f32 to vector<4x256xf32>
    %328 = arith.select %326, %324, %327 : vector<4x256xi1>, vector<4x256xf32>
    %c0_119 = arith.constant 0 : index
    %c0_120 = arith.constant 0 : index
    %c0_121 = arith.constant 0 : index
    %329 = vector.load %arg1[%c0_119, %c0_120, %c0_121] : memref<36x8x1xf32, #tpu.memory_space<vmem>>, vector<1x8x1xf32>
    %330 = vector.shape_cast %329 : vector<1x8x1xf32> to vector<8x1xf32>
    %331 = vector.extract_strided_slice %328 {offsets = [0, 0], sizes = [1, 256], strides = [1, 1]} : vector<4x256xf32> to vector<1x256xf32>
    %332 = vector.broadcast %330 : vector<8x1xf32> to vector<8x256xf32>
    %333 = vector.broadcast %331 : vector<1x256xf32> to vector<8x256xf32>
    %334 = arith.mulf %332, %333 : vector<8x256xf32>
    %335 = arith.addf %322, %334 : vector<8x256xf32>
    %c1_122 = arith.constant 1 : index
    %c0_123 = arith.constant 0 : index
    %c0_124 = arith.constant 0 : index
    %336 = vector.load %arg1[%c1_122, %c0_123, %c0_124] : memref<36x8x1xf32, #tpu.memory_space<vmem>>, vector<1x8x1xf32>
    %337 = vector.shape_cast %336 : vector<1x8x1xf32> to vector<8x1xf32>
    %338 = vector.extract_strided_slice %328 {offsets = [1, 0], sizes = [1, 256], strides = [1, 1]} : vector<4x256xf32> to vector<1x256xf32>
    %339 = vector.broadcast %337 : vector<8x1xf32> to vector<8x256xf32>
    %340 = vector.broadcast %338 : vector<1x256xf32> to vector<8x256xf32>
    %341 = arith.mulf %339, %340 : vector<8x256xf32>
    %342 = arith.addf %335, %341 : vector<8x256xf32>
    %c2_125 = arith.constant 2 : index
    %c0_126 = arith.constant 0 : index
    %c0_127 = arith.constant 0 : index
    %343 = vector.load %arg1[%c2_125, %c0_126, %c0_127] : memref<36x8x1xf32, #tpu.memory_space<vmem>>, vector<1x8x1xf32>
    %344 = vector.shape_cast %343 : vector<1x8x1xf32> to vector<8x1xf32>
    %345 = vector.extract_strided_slice %328 {offsets = [2, 0], sizes = [1, 256], strides = [1, 1]} : vector<4x256xf32> to vector<1x256xf32>
    %346 = vector.broadcast %344 : vector<8x1xf32> to vector<8x256xf32>
    %347 = vector.broadcast %345 : vector<1x256xf32> to vector<8x256xf32>
    %348 = arith.mulf %346, %347 : vector<8x256xf32>
    %349 = arith.addf %342, %348 : vector<8x256xf32>
    %c3_128 = arith.constant 3 : index
    %c0_129 = arith.constant 0 : index
    %c0_130 = arith.constant 0 : index
    %350 = vector.load %arg1[%c3_128, %c0_129, %c0_130] : memref<36x8x1xf32, #tpu.memory_space<vmem>>, vector<1x8x1xf32>
    %351 = vector.shape_cast %350 : vector<1x8x1xf32> to vector<8x1xf32>
    %352 = vector.extract_strided_slice %328 {offsets = [3, 0], sizes = [1, 256], strides = [1, 1]} : vector<4x256xf32> to vector<1x256xf32>
    %353 = vector.broadcast %351 : vector<8x1xf32> to vector<8x256xf32>
    %354 = vector.broadcast %352 : vector<1x256xf32> to vector<8x256xf32>
    %355 = arith.mulf %353, %354 : vector<8x256xf32>
    %356 = arith.addf %349, %355 : vector<8x256xf32>
    %c1_131 = arith.constant 1 : index
    %c0_132 = arith.constant 0 : index
    %c1_133 = arith.constant 1 : index
    %357 = vector.load %arg0[%c1_131, %c0_132, %c1_133] : memref<2x4x290xf32, #tpu.memory_space<vmem>>, vector<1x4x256xf32>
    %358 = vector.shape_cast %357 : vector<1x4x256xf32> to vector<4x256xf32>
    %c4_134 = arith.constant 4 : index
    %c0_135 = arith.constant 0 : index
    %c0_136 = arith.constant 0 : index
    %359 = vector.load %arg1[%c4_134, %c0_135, %c0_136] : memref<36x8x1xf32, #tpu.memory_space<vmem>>, vector<1x8x1xf32>
    %360 = vector.shape_cast %359 : vector<1x8x1xf32> to vector<8x1xf32>
    %361 = vector.extract_strided_slice %358 {offsets = [0, 0], sizes = [1, 256], strides = [1, 1]} : vector<4x256xf32> to vector<1x256xf32>
    %362 = vector.broadcast %360 : vector<8x1xf32> to vector<8x256xf32>
    %363 = vector.broadcast %361 : vector<1x256xf32> to vector<8x256xf32>
    %364 = arith.mulf %362, %363 : vector<8x256xf32>
    %365 = arith.addf %356, %364 : vector<8x256xf32>
    %c5_137 = arith.constant 5 : index
    %c0_138 = arith.constant 0 : index
    %c0_139 = arith.constant 0 : index
    %366 = vector.load %arg1[%c5_137, %c0_138, %c0_139] : memref<36x8x1xf32, #tpu.memory_space<vmem>>, vector<1x8x1xf32>
    %367 = vector.shape_cast %366 : vector<1x8x1xf32> to vector<8x1xf32>
    %368 = vector.extract_strided_slice %358 {offsets = [1, 0], sizes = [1, 256], strides = [1, 1]} : vector<4x256xf32> to vector<1x256xf32>
    %369 = vector.broadcast %367 : vector<8x1xf32> to vector<8x256xf32>
    %370 = vector.broadcast %368 : vector<1x256xf32> to vector<8x256xf32>
    %371 = arith.mulf %369, %370 : vector<8x256xf32>
    %372 = arith.addf %365, %371 : vector<8x256xf32>
    %c6_140 = arith.constant 6 : index
    %c0_141 = arith.constant 0 : index
    %c0_142 = arith.constant 0 : index
    %373 = vector.load %arg1[%c6_140, %c0_141, %c0_142] : memref<36x8x1xf32, #tpu.memory_space<vmem>>, vector<1x8x1xf32>
    %374 = vector.shape_cast %373 : vector<1x8x1xf32> to vector<8x1xf32>
    %375 = vector.extract_strided_slice %358 {offsets = [2, 0], sizes = [1, 256], strides = [1, 1]} : vector<4x256xf32> to vector<1x256xf32>
    %376 = vector.broadcast %374 : vector<8x1xf32> to vector<8x256xf32>
    %377 = vector.broadcast %375 : vector<1x256xf32> to vector<8x256xf32>
    %378 = arith.mulf %376, %377 : vector<8x256xf32>
    %379 = arith.addf %372, %378 : vector<8x256xf32>
    %c7_143 = arith.constant 7 : index
    %c0_144 = arith.constant 0 : index
    %c0_145 = arith.constant 0 : index
    %380 = vector.load %arg1[%c7_143, %c0_144, %c0_145] : memref<36x8x1xf32, #tpu.memory_space<vmem>>, vector<1x8x1xf32>
    %381 = vector.shape_cast %380 : vector<1x8x1xf32> to vector<8x1xf32>
    %382 = vector.extract_strided_slice %358 {offsets = [3, 0], sizes = [1, 256], strides = [1, 1]} : vector<4x256xf32> to vector<1x256xf32>
    %383 = vector.broadcast %381 : vector<8x1xf32> to vector<8x256xf32>
    %384 = vector.broadcast %382 : vector<1x256xf32> to vector<8x256xf32>
    %385 = arith.mulf %383, %384 : vector<8x256xf32>
    %386 = arith.addf %379, %385 : vector<8x256xf32>
    %c1_146 = arith.constant 1 : index
    %c0_147 = arith.constant 0 : index
    %c2_148 = arith.constant 2 : index
    %387 = vector.load %arg0[%c1_146, %c0_147, %c2_148] : memref<2x4x290xf32, #tpu.memory_space<vmem>>, vector<1x4x256xf32>
    %388 = vector.shape_cast %387 : vector<1x4x256xf32> to vector<4x256xf32>
    %cst_149 = arith.constant 0.000000e+00 : f32
    %389 = vector.shape_cast %20 : vector<1x256xi1> to vector<1x256xi1>
    %390 = vector.broadcast %389 : vector<1x256xi1> to vector<4x256xi1>
    %391 = vector.broadcast %cst_149 : f32 to vector<4x256xf32>
    %392 = arith.select %390, %388, %391 : vector<4x256xi1>, vector<4x256xf32>
    %c8_150 = arith.constant 8 : index
    %c0_151 = arith.constant 0 : index
    %c0_152 = arith.constant 0 : index
    %393 = vector.load %arg1[%c8_150, %c0_151, %c0_152] : memref<36x8x1xf32, #tpu.memory_space<vmem>>, vector<1x8x1xf32>
    %394 = vector.shape_cast %393 : vector<1x8x1xf32> to vector<8x1xf32>
    %395 = vector.extract_strided_slice %392 {offsets = [0, 0], sizes = [1, 256], strides = [1, 1]} : vector<4x256xf32> to vector<1x256xf32>
    %396 = vector.broadcast %394 : vector<8x1xf32> to vector<8x256xf32>
    %397 = vector.broadcast %395 : vector<1x256xf32> to vector<8x256xf32>
    %398 = arith.mulf %396, %397 : vector<8x256xf32>
    %399 = arith.addf %386, %398 : vector<8x256xf32>
    %c9_153 = arith.constant 9 : index
    %c0_154 = arith.constant 0 : index
    %c0_155 = arith.constant 0 : index
    %400 = vector.load %arg1[%c9_153, %c0_154, %c0_155] : memref<36x8x1xf32, #tpu.memory_space<vmem>>, vector<1x8x1xf32>
    %401 = vector.shape_cast %400 : vector<1x8x1xf32> to vector<8x1xf32>
    %402 = vector.extract_strided_slice %392 {offsets = [1, 0], sizes = [1, 256], strides = [1, 1]} : vector<4x256xf32> to vector<1x256xf32>
    %403 = vector.broadcast %401 : vector<8x1xf32> to vector<8x256xf32>
    %404 = vector.broadcast %402 : vector<1x256xf32> to vector<8x256xf32>
    %405 = arith.mulf %403, %404 : vector<8x256xf32>
    %406 = arith.addf %399, %405 : vector<8x256xf32>
    %c10_156 = arith.constant 10 : index
    %c0_157 = arith.constant 0 : index
    %c0_158 = arith.constant 0 : index
    %407 = vector.load %arg1[%c10_156, %c0_157, %c0_158] : memref<36x8x1xf32, #tpu.memory_space<vmem>>, vector<1x8x1xf32>
    %408 = vector.shape_cast %407 : vector<1x8x1xf32> to vector<8x1xf32>
    %409 = vector.extract_strided_slice %392 {offsets = [2, 0], sizes = [1, 256], strides = [1, 1]} : vector<4x256xf32> to vector<1x256xf32>
    %410 = vector.broadcast %408 : vector<8x1xf32> to vector<8x256xf32>
    %411 = vector.broadcast %409 : vector<1x256xf32> to vector<8x256xf32>
    %412 = arith.mulf %410, %411 : vector<8x256xf32>
    %413 = arith.addf %406, %412 : vector<8x256xf32>
    %c11_159 = arith.constant 11 : index
    %c0_160 = arith.constant 0 : index
    %c0_161 = arith.constant 0 : index
    %414 = vector.load %arg1[%c11_159, %c0_160, %c0_161] : memref<36x8x1xf32, #tpu.memory_space<vmem>>, vector<1x8x1xf32>
    %415 = vector.shape_cast %414 : vector<1x8x1xf32> to vector<8x1xf32>
    %416 = vector.extract_strided_slice %392 {offsets = [3, 0], sizes = [1, 256], strides = [1, 1]} : vector<4x256xf32> to vector<1x256xf32>
    %417 = vector.broadcast %415 : vector<8x1xf32> to vector<8x256xf32>
    %418 = vector.broadcast %416 : vector<1x256xf32> to vector<8x256xf32>
    %419 = arith.mulf %417, %418 : vector<8x256xf32>
    %420 = arith.addf %413, %419 : vector<8x256xf32>
    %c1_162 = arith.constant 1 : index
    %c0_163 = arith.constant 0 : index
    %c16_164 = arith.constant 16 : index
    %421 = vector.load %arg0[%c1_162, %c0_163, %c16_164] : memref<2x4x290xf32, #tpu.memory_space<vmem>>, vector<1x4x256xf32>
    %422 = vector.shape_cast %421 : vector<1x4x256xf32> to vector<4x256xf32>
    %cst_165 = arith.constant 0.000000e+00 : f32
    %423 = vector.shape_cast %18 : vector<1x256xi1> to vector<1x256xi1>
    %424 = vector.broadcast %423 : vector<1x256xi1> to vector<4x256xi1>
    %425 = vector.broadcast %cst_165 : f32 to vector<4x256xf32>
    %426 = arith.select %424, %422, %425 : vector<4x256xi1>, vector<4x256xf32>
    %c12_166 = arith.constant 12 : index
    %c0_167 = arith.constant 0 : index
    %c0_168 = arith.constant 0 : index
    %427 = vector.load %arg1[%c12_166, %c0_167, %c0_168] : memref<36x8x1xf32, #tpu.memory_space<vmem>>, vector<1x8x1xf32>
    %428 = vector.shape_cast %427 : vector<1x8x1xf32> to vector<8x1xf32>
    %429 = vector.extract_strided_slice %426 {offsets = [0, 0], sizes = [1, 256], strides = [1, 1]} : vector<4x256xf32> to vector<1x256xf32>
    %430 = vector.broadcast %428 : vector<8x1xf32> to vector<8x256xf32>
    %431 = vector.broadcast %429 : vector<1x256xf32> to vector<8x256xf32>
    %432 = arith.mulf %430, %431 : vector<8x256xf32>
    %433 = arith.addf %420, %432 : vector<8x256xf32>
    %c13_169 = arith.constant 13 : index
    %c0_170 = arith.constant 0 : index
    %c0_171 = arith.constant 0 : index
    %434 = vector.load %arg1[%c13_169, %c0_170, %c0_171] : memref<36x8x1xf32, #tpu.memory_space<vmem>>, vector<1x8x1xf32>
    %435 = vector.shape_cast %434 : vector<1x8x1xf32> to vector<8x1xf32>
    %436 = vector.extract_strided_slice %426 {offsets = [1, 0], sizes = [1, 256], strides = [1, 1]} : vector<4x256xf32> to vector<1x256xf32>
    %437 = vector.broadcast %435 : vector<8x1xf32> to vector<8x256xf32>
    %438 = vector.broadcast %436 : vector<1x256xf32> to vector<8x256xf32>
    %439 = arith.mulf %437, %438 : vector<8x256xf32>
    %440 = arith.addf %433, %439 : vector<8x256xf32>
    %c14_172 = arith.constant 14 : index
    %c0_173 = arith.constant 0 : index
    %c0_174 = arith.constant 0 : index
    %441 = vector.load %arg1[%c14_172, %c0_173, %c0_174] : memref<36x8x1xf32, #tpu.memory_space<vmem>>, vector<1x8x1xf32>
    %442 = vector.shape_cast %441 : vector<1x8x1xf32> to vector<8x1xf32>
    %443 = vector.extract_strided_slice %426 {offsets = [2, 0], sizes = [1, 256], strides = [1, 1]} : vector<4x256xf32> to vector<1x256xf32>
    %444 = vector.broadcast %442 : vector<8x1xf32> to vector<8x256xf32>
    %445 = vector.broadcast %443 : vector<1x256xf32> to vector<8x256xf32>
    %446 = arith.mulf %444, %445 : vector<8x256xf32>
    %447 = arith.addf %440, %446 : vector<8x256xf32>
    %c15_175 = arith.constant 15 : index
    %c0_176 = arith.constant 0 : index
    %c0_177 = arith.constant 0 : index
    %448 = vector.load %arg1[%c15_175, %c0_176, %c0_177] : memref<36x8x1xf32, #tpu.memory_space<vmem>>, vector<1x8x1xf32>
    %449 = vector.shape_cast %448 : vector<1x8x1xf32> to vector<8x1xf32>
    %450 = vector.extract_strided_slice %426 {offsets = [3, 0], sizes = [1, 256], strides = [1, 1]} : vector<4x256xf32> to vector<1x256xf32>
    %451 = vector.broadcast %449 : vector<8x1xf32> to vector<8x256xf32>
    %452 = vector.broadcast %450 : vector<1x256xf32> to vector<8x256xf32>
    %453 = arith.mulf %451, %452 : vector<8x256xf32>
    %454 = arith.addf %447, %453 : vector<8x256xf32>
    %c1_178 = arith.constant 1 : index
    %c0_179 = arith.constant 0 : index
    %c17_180 = arith.constant 17 : index
    %455 = vector.load %arg0[%c1_178, %c0_179, %c17_180] : memref<2x4x290xf32, #tpu.memory_space<vmem>>, vector<1x4x256xf32>
    %456 = vector.shape_cast %455 : vector<1x4x256xf32> to vector<4x256xf32>
    %c16_181 = arith.constant 16 : index
    %c0_182 = arith.constant 0 : index
    %c0_183 = arith.constant 0 : index
    %457 = vector.load %arg1[%c16_181, %c0_182, %c0_183] : memref<36x8x1xf32, #tpu.memory_space<vmem>>, vector<1x8x1xf32>
    %458 = vector.shape_cast %457 : vector<1x8x1xf32> to vector<8x1xf32>
    %459 = vector.extract_strided_slice %456 {offsets = [0, 0], sizes = [1, 256], strides = [1, 1]} : vector<4x256xf32> to vector<1x256xf32>
    %460 = vector.broadcast %458 : vector<8x1xf32> to vector<8x256xf32>
    %461 = vector.broadcast %459 : vector<1x256xf32> to vector<8x256xf32>
    %462 = arith.mulf %460, %461 : vector<8x256xf32>
    %463 = arith.addf %454, %462 : vector<8x256xf32>
    %c17_184 = arith.constant 17 : index
    %c0_185 = arith.constant 0 : index
    %c0_186 = arith.constant 0 : index
    %464 = vector.load %arg1[%c17_184, %c0_185, %c0_186] : memref<36x8x1xf32, #tpu.memory_space<vmem>>, vector<1x8x1xf32>
    %465 = vector.shape_cast %464 : vector<1x8x1xf32> to vector<8x1xf32>
    %466 = vector.extract_strided_slice %456 {offsets = [1, 0], sizes = [1, 256], strides = [1, 1]} : vector<4x256xf32> to vector<1x256xf32>
    %467 = vector.broadcast %465 : vector<8x1xf32> to vector<8x256xf32>
    %468 = vector.broadcast %466 : vector<1x256xf32> to vector<8x256xf32>
    %469 = arith.mulf %467, %468 : vector<8x256xf32>
    %470 = arith.addf %463, %469 : vector<8x256xf32>
    %c18_187 = arith.constant 18 : index
    %c0_188 = arith.constant 0 : index
    %c0_189 = arith.constant 0 : index
    %471 = vector.load %arg1[%c18_187, %c0_188, %c0_189] : memref<36x8x1xf32, #tpu.memory_space<vmem>>, vector<1x8x1xf32>
    %472 = vector.shape_cast %471 : vector<1x8x1xf32> to vector<8x1xf32>
    %473 = vector.extract_strided_slice %456 {offsets = [2, 0], sizes = [1, 256], strides = [1, 1]} : vector<4x256xf32> to vector<1x256xf32>
    %474 = vector.broadcast %472 : vector<8x1xf32> to vector<8x256xf32>
    %475 = vector.broadcast %473 : vector<1x256xf32> to vector<8x256xf32>
    %476 = arith.mulf %474, %475 : vector<8x256xf32>
    %477 = arith.addf %470, %476 : vector<8x256xf32>
    %c19_190 = arith.constant 19 : index
    %c0_191 = arith.constant 0 : index
    %c0_192 = arith.constant 0 : index
    %478 = vector.load %arg1[%c19_190, %c0_191, %c0_192] : memref<36x8x1xf32, #tpu.memory_space<vmem>>, vector<1x8x1xf32>
    %479 = vector.shape_cast %478 : vector<1x8x1xf32> to vector<8x1xf32>
    %480 = vector.extract_strided_slice %456 {offsets = [3, 0], sizes = [1, 256], strides = [1, 1]} : vector<4x256xf32> to vector<1x256xf32>
    %481 = vector.broadcast %479 : vector<8x1xf32> to vector<8x256xf32>
    %482 = vector.broadcast %480 : vector<1x256xf32> to vector<8x256xf32>
    %483 = arith.mulf %481, %482 : vector<8x256xf32>
    %484 = arith.addf %477, %483 : vector<8x256xf32>
    %c1_193 = arith.constant 1 : index
    %c0_194 = arith.constant 0 : index
    %c18_195 = arith.constant 18 : index
    %485 = vector.load %arg0[%c1_193, %c0_194, %c18_195] : memref<2x4x290xf32, #tpu.memory_space<vmem>>, vector<1x4x256xf32>
    %486 = vector.shape_cast %485 : vector<1x4x256xf32> to vector<4x256xf32>
    %cst_196 = arith.constant 0.000000e+00 : f32
    %487 = vector.shape_cast %20 : vector<1x256xi1> to vector<1x256xi1>
    %488 = vector.broadcast %487 : vector<1x256xi1> to vector<4x256xi1>
    %489 = vector.broadcast %cst_196 : f32 to vector<4x256xf32>
    %490 = arith.select %488, %486, %489 : vector<4x256xi1>, vector<4x256xf32>
    %c20_197 = arith.constant 20 : index
    %c0_198 = arith.constant 0 : index
    %c0_199 = arith.constant 0 : index
    %491 = vector.load %arg1[%c20_197, %c0_198, %c0_199] : memref<36x8x1xf32, #tpu.memory_space<vmem>>, vector<1x8x1xf32>
    %492 = vector.shape_cast %491 : vector<1x8x1xf32> to vector<8x1xf32>
    %493 = vector.extract_strided_slice %490 {offsets = [0, 0], sizes = [1, 256], strides = [1, 1]} : vector<4x256xf32> to vector<1x256xf32>
    %494 = vector.broadcast %492 : vector<8x1xf32> to vector<8x256xf32>
    %495 = vector.broadcast %493 : vector<1x256xf32> to vector<8x256xf32>
    %496 = arith.mulf %494, %495 : vector<8x256xf32>
    %497 = arith.addf %484, %496 : vector<8x256xf32>
    %c21_200 = arith.constant 21 : index
    %c0_201 = arith.constant 0 : index
    %c0_202 = arith.constant 0 : index
    %498 = vector.load %arg1[%c21_200, %c0_201, %c0_202] : memref<36x8x1xf32, #tpu.memory_space<vmem>>, vector<1x8x1xf32>
    %499 = vector.shape_cast %498 : vector<1x8x1xf32> to vector<8x1xf32>
    %500 = vector.extract_strided_slice %490 {offsets = [1, 0], sizes = [1, 256], strides = [1, 1]} : vector<4x256xf32> to vector<1x256xf32>
    %501 = vector.broadcast %499 : vector<8x1xf32> to vector<8x256xf32>
    %502 = vector.broadcast %500 : vector<1x256xf32> to vector<8x256xf32>
    %503 = arith.mulf %501, %502 : vector<8x256xf32>
    %504 = arith.addf %497, %503 : vector<8x256xf32>
    %c22_203 = arith.constant 22 : index
    %c0_204 = arith.constant 0 : index
    %c0_205 = arith.constant 0 : index
    %505 = vector.load %arg1[%c22_203, %c0_204, %c0_205] : memref<36x8x1xf32, #tpu.memory_space<vmem>>, vector<1x8x1xf32>
    %506 = vector.shape_cast %505 : vector<1x8x1xf32> to vector<8x1xf32>
    %507 = vector.extract_strided_slice %490 {offsets = [2, 0], sizes = [1, 256], strides = [1, 1]} : vector<4x256xf32> to vector<1x256xf32>
    %508 = vector.broadcast %506 : vector<8x1xf32> to vector<8x256xf32>
    %509 = vector.broadcast %507 : vector<1x256xf32> to vector<8x256xf32>
    %510 = arith.mulf %508, %509 : vector<8x256xf32>
    %511 = arith.addf %504, %510 : vector<8x256xf32>
    %c23_206 = arith.constant 23 : index
    %c0_207 = arith.constant 0 : index
    %c0_208 = arith.constant 0 : index
    %512 = vector.load %arg1[%c23_206, %c0_207, %c0_208] : memref<36x8x1xf32, #tpu.memory_space<vmem>>, vector<1x8x1xf32>
    %513 = vector.shape_cast %512 : vector<1x8x1xf32> to vector<8x1xf32>
    %514 = vector.extract_strided_slice %490 {offsets = [3, 0], sizes = [1, 256], strides = [1, 1]} : vector<4x256xf32> to vector<1x256xf32>
    %515 = vector.broadcast %513 : vector<8x1xf32> to vector<8x256xf32>
    %516 = vector.broadcast %514 : vector<1x256xf32> to vector<8x256xf32>
    %517 = arith.mulf %515, %516 : vector<8x256xf32>
    %518 = arith.addf %511, %517 : vector<8x256xf32>
    %c1_209 = arith.constant 1 : index
    %c0_210 = arith.constant 0 : index
    %c32_211 = arith.constant 32 : index
    %519 = vector.load %arg0[%c1_209, %c0_210, %c32_211] : memref<2x4x290xf32, #tpu.memory_space<vmem>>, vector<1x4x256xf32>
    %520 = vector.shape_cast %519 : vector<1x4x256xf32> to vector<4x256xf32>
    %cst_212 = arith.constant 0.000000e+00 : f32
    %521 = vector.shape_cast %18 : vector<1x256xi1> to vector<1x256xi1>
    %522 = vector.broadcast %521 : vector<1x256xi1> to vector<4x256xi1>
    %523 = vector.broadcast %cst_212 : f32 to vector<4x256xf32>
    %524 = arith.select %522, %520, %523 : vector<4x256xi1>, vector<4x256xf32>
    %c24_213 = arith.constant 24 : index
    %c0_214 = arith.constant 0 : index
    %c0_215 = arith.constant 0 : index
    %525 = vector.load %arg1[%c24_213, %c0_214, %c0_215] : memref<36x8x1xf32, #tpu.memory_space<vmem>>, vector<1x8x1xf32>
    %526 = vector.shape_cast %525 : vector<1x8x1xf32> to vector<8x1xf32>
    %527 = vector.extract_strided_slice %524 {offsets = [0, 0], sizes = [1, 256], strides = [1, 1]} : vector<4x256xf32> to vector<1x256xf32>
    %528 = vector.broadcast %526 : vector<8x1xf32> to vector<8x256xf32>
    %529 = vector.broadcast %527 : vector<1x256xf32> to vector<8x256xf32>
    %530 = arith.mulf %528, %529 : vector<8x256xf32>
    %531 = arith.addf %518, %530 : vector<8x256xf32>
    %c25_216 = arith.constant 25 : index
    %c0_217 = arith.constant 0 : index
    %c0_218 = arith.constant 0 : index
    %532 = vector.load %arg1[%c25_216, %c0_217, %c0_218] : memref<36x8x1xf32, #tpu.memory_space<vmem>>, vector<1x8x1xf32>
    %533 = vector.shape_cast %532 : vector<1x8x1xf32> to vector<8x1xf32>
    %534 = vector.extract_strided_slice %524 {offsets = [1, 0], sizes = [1, 256], strides = [1, 1]} : vector<4x256xf32> to vector<1x256xf32>
    %535 = vector.broadcast %533 : vector<8x1xf32> to vector<8x256xf32>
    %536 = vector.broadcast %534 : vector<1x256xf32> to vector<8x256xf32>
    %537 = arith.mulf %535, %536 : vector<8x256xf32>
    %538 = arith.addf %531, %537 : vector<8x256xf32>
    %c26_219 = arith.constant 26 : index
    %c0_220 = arith.constant 0 : index
    %c0_221 = arith.constant 0 : index
    %539 = vector.load %arg1[%c26_219, %c0_220, %c0_221] : memref<36x8x1xf32, #tpu.memory_space<vmem>>, vector<1x8x1xf32>
    %540 = vector.shape_cast %539 : vector<1x8x1xf32> to vector<8x1xf32>
    %541 = vector.extract_strided_slice %524 {offsets = [2, 0], sizes = [1, 256], strides = [1, 1]} : vector<4x256xf32> to vector<1x256xf32>
    %542 = vector.broadcast %540 : vector<8x1xf32> to vector<8x256xf32>
    %543 = vector.broadcast %541 : vector<1x256xf32> to vector<8x256xf32>
    %544 = arith.mulf %542, %543 : vector<8x256xf32>
    %545 = arith.addf %538, %544 : vector<8x256xf32>
    %c27_222 = arith.constant 27 : index
    %c0_223 = arith.constant 0 : index
    %c0_224 = arith.constant 0 : index
    %546 = vector.load %arg1[%c27_222, %c0_223, %c0_224] : memref<36x8x1xf32, #tpu.memory_space<vmem>>, vector<1x8x1xf32>
    %547 = vector.shape_cast %546 : vector<1x8x1xf32> to vector<8x1xf32>
    %548 = vector.extract_strided_slice %524 {offsets = [3, 0], sizes = [1, 256], strides = [1, 1]} : vector<4x256xf32> to vector<1x256xf32>
    %549 = vector.broadcast %547 : vector<8x1xf32> to vector<8x256xf32>
    %550 = vector.broadcast %548 : vector<1x256xf32> to vector<8x256xf32>
    %551 = arith.mulf %549, %550 : vector<8x256xf32>
    %552 = arith.addf %545, %551 : vector<8x256xf32>
    %c1_225 = arith.constant 1 : index
    %c0_226 = arith.constant 0 : index
    %c33_227 = arith.constant 33 : index
    %553 = vector.load %arg0[%c1_225, %c0_226, %c33_227] : memref<2x4x290xf32, #tpu.memory_space<vmem>>, vector<1x4x256xf32>
    %554 = vector.shape_cast %553 : vector<1x4x256xf32> to vector<4x256xf32>
    %c28_228 = arith.constant 28 : index
    %c0_229 = arith.constant 0 : index
    %c0_230 = arith.constant 0 : index
    %555 = vector.load %arg1[%c28_228, %c0_229, %c0_230] : memref<36x8x1xf32, #tpu.memory_space<vmem>>, vector<1x8x1xf32>
    %556 = vector.shape_cast %555 : vector<1x8x1xf32> to vector<8x1xf32>
    %557 = vector.extract_strided_slice %554 {offsets = [0, 0], sizes = [1, 256], strides = [1, 1]} : vector<4x256xf32> to vector<1x256xf32>
    %558 = vector.broadcast %556 : vector<8x1xf32> to vector<8x256xf32>
    %559 = vector.broadcast %557 : vector<1x256xf32> to vector<8x256xf32>
    %560 = arith.mulf %558, %559 : vector<8x256xf32>
    %561 = arith.addf %552, %560 : vector<8x256xf32>
    %c29_231 = arith.constant 29 : index
    %c0_232 = arith.constant 0 : index
    %c0_233 = arith.constant 0 : index
    %562 = vector.load %arg1[%c29_231, %c0_232, %c0_233] : memref<36x8x1xf32, #tpu.memory_space<vmem>>, vector<1x8x1xf32>
    %563 = vector.shape_cast %562 : vector<1x8x1xf32> to vector<8x1xf32>
    %564 = vector.extract_strided_slice %554 {offsets = [1, 0], sizes = [1, 256], strides = [1, 1]} : vector<4x256xf32> to vector<1x256xf32>
    %565 = vector.broadcast %563 : vector<8x1xf32> to vector<8x256xf32>
    %566 = vector.broadcast %564 : vector<1x256xf32> to vector<8x256xf32>
    %567 = arith.mulf %565, %566 : vector<8x256xf32>
    %568 = arith.addf %561, %567 : vector<8x256xf32>
    %c30_234 = arith.constant 30 : index
    %c0_235 = arith.constant 0 : index
    %c0_236 = arith.constant 0 : index
    %569 = vector.load %arg1[%c30_234, %c0_235, %c0_236] : memref<36x8x1xf32, #tpu.memory_space<vmem>>, vector<1x8x1xf32>
    %570 = vector.shape_cast %569 : vector<1x8x1xf32> to vector<8x1xf32>
    %571 = vector.extract_strided_slice %554 {offsets = [2, 0], sizes = [1, 256], strides = [1, 1]} : vector<4x256xf32> to vector<1x256xf32>
    %572 = vector.broadcast %570 : vector<8x1xf32> to vector<8x256xf32>
    %573 = vector.broadcast %571 : vector<1x256xf32> to vector<8x256xf32>
    %574 = arith.mulf %572, %573 : vector<8x256xf32>
    %575 = arith.addf %568, %574 : vector<8x256xf32>
    %c31_237 = arith.constant 31 : index
    %c0_238 = arith.constant 0 : index
    %c0_239 = arith.constant 0 : index
    %576 = vector.load %arg1[%c31_237, %c0_238, %c0_239] : memref<36x8x1xf32, #tpu.memory_space<vmem>>, vector<1x8x1xf32>
    %577 = vector.shape_cast %576 : vector<1x8x1xf32> to vector<8x1xf32>
    %578 = vector.extract_strided_slice %554 {offsets = [3, 0], sizes = [1, 256], strides = [1, 1]} : vector<4x256xf32> to vector<1x256xf32>
    %579 = vector.broadcast %577 : vector<8x1xf32> to vector<8x256xf32>
    %580 = vector.broadcast %578 : vector<1x256xf32> to vector<8x256xf32>
    %581 = arith.mulf %579, %580 : vector<8x256xf32>
    %582 = arith.addf %575, %581 : vector<8x256xf32>
    %c1_240 = arith.constant 1 : index
    %c0_241 = arith.constant 0 : index
    %c34_242 = arith.constant 34 : index
    %583 = vector.load %arg0[%c1_240, %c0_241, %c34_242] : memref<2x4x290xf32, #tpu.memory_space<vmem>>, vector<1x4x256xf32>
    %584 = vector.shape_cast %583 : vector<1x4x256xf32> to vector<4x256xf32>
    %cst_243 = arith.constant 0.000000e+00 : f32
    %585 = vector.shape_cast %20 : vector<1x256xi1> to vector<1x256xi1>
    %586 = vector.broadcast %585 : vector<1x256xi1> to vector<4x256xi1>
    %587 = vector.broadcast %cst_243 : f32 to vector<4x256xf32>
    %588 = arith.select %586, %584, %587 : vector<4x256xi1>, vector<4x256xf32>
    %c32_244 = arith.constant 32 : index
    %c0_245 = arith.constant 0 : index
    %c0_246 = arith.constant 0 : index
    %589 = vector.load %arg1[%c32_244, %c0_245, %c0_246] : memref<36x8x1xf32, #tpu.memory_space<vmem>>, vector<1x8x1xf32>
    %590 = vector.shape_cast %589 : vector<1x8x1xf32> to vector<8x1xf32>
    %591 = vector.extract_strided_slice %588 {offsets = [0, 0], sizes = [1, 256], strides = [1, 1]} : vector<4x256xf32> to vector<1x256xf32>
    %592 = vector.broadcast %590 : vector<8x1xf32> to vector<8x256xf32>
    %593 = vector.broadcast %591 : vector<1x256xf32> to vector<8x256xf32>
    %594 = arith.mulf %592, %593 : vector<8x256xf32>
    %595 = arith.addf %582, %594 : vector<8x256xf32>
    %c33_247 = arith.constant 33 : index
    %c0_248 = arith.constant 0 : index
    %c0_249 = arith.constant 0 : index
    %596 = vector.load %arg1[%c33_247, %c0_248, %c0_249] : memref<36x8x1xf32, #tpu.memory_space<vmem>>, vector<1x8x1xf32>
    %597 = vector.shape_cast %596 : vector<1x8x1xf32> to vector<8x1xf32>
    %598 = vector.extract_strided_slice %588 {offsets = [1, 0], sizes = [1, 256], strides = [1, 1]} : vector<4x256xf32> to vector<1x256xf32>
    %599 = vector.broadcast %597 : vector<8x1xf32> to vector<8x256xf32>
    %600 = vector.broadcast %598 : vector<1x256xf32> to vector<8x256xf32>
    %601 = arith.mulf %599, %600 : vector<8x256xf32>
    %602 = arith.addf %595, %601 : vector<8x256xf32>
    %c34_250 = arith.constant 34 : index
    %c0_251 = arith.constant 0 : index
    %c0_252 = arith.constant 0 : index
    %603 = vector.load %arg1[%c34_250, %c0_251, %c0_252] : memref<36x8x1xf32, #tpu.memory_space<vmem>>, vector<1x8x1xf32>
    %604 = vector.shape_cast %603 : vector<1x8x1xf32> to vector<8x1xf32>
    %605 = vector.extract_strided_slice %588 {offsets = [2, 0], sizes = [1, 256], strides = [1, 1]} : vector<4x256xf32> to vector<1x256xf32>
    %606 = vector.broadcast %604 : vector<8x1xf32> to vector<8x256xf32>
    %607 = vector.broadcast %605 : vector<1x256xf32> to vector<8x256xf32>
    %608 = arith.mulf %606, %607 : vector<8x256xf32>
    %609 = arith.addf %602, %608 : vector<8x256xf32>
    %c35_253 = arith.constant 35 : index
    %c0_254 = arith.constant 0 : index
    %c0_255 = arith.constant 0 : index
    %610 = vector.load %arg1[%c35_253, %c0_254, %c0_255] : memref<36x8x1xf32, #tpu.memory_space<vmem>>, vector<1x8x1xf32>
    %611 = vector.shape_cast %610 : vector<1x8x1xf32> to vector<8x1xf32>
    %612 = vector.extract_strided_slice %588 {offsets = [3, 0], sizes = [1, 256], strides = [1, 1]} : vector<4x256xf32> to vector<1x256xf32>
    %613 = vector.broadcast %611 : vector<8x1xf32> to vector<8x256xf32>
    %614 = vector.broadcast %612 : vector<1x256xf32> to vector<8x256xf32>
    %615 = arith.mulf %613, %614 : vector<8x256xf32>
    %616 = arith.addf %609, %615 : vector<8x256xf32>
    %c0_256 = arith.constant 0 : index
    %c0_257 = arith.constant 0 : index
    %617 = vector.load %arg2[%c0_256, %c0_257] : memref<8x1xf32, #tpu.memory_space<vmem>>, vector<8x1xf32>
    %618 = vector.broadcast %617 : vector<8x1xf32> to vector<8x256xf32>
    %619 = arith.addf %616, %618 : vector<8x256xf32>
    %c1_258 = arith.constant 1 : index
    %c0_259 = arith.constant 0 : index
    %c0_260 = arith.constant 0 : index
    %620 = vector.load %arg3[%c1_258, %c0_259, %c0_260] : memref<2x8x256xf32, #tpu.memory_space<vmem>>, vector<1x8x256xf32>
    %621 = vector.shape_cast %620 : vector<1x8x256xf32> to vector<8x256xf32>
    %622 = vector.shape_cast %619 : vector<8x256xf32> to vector<1x8x256xf32>
    tpu.vector_store %arg3[%c1_258, %c0_259, %c0_260], %622 {strides = array<i32>} : memref<2x8x256xf32, #tpu.memory_space<vmem>>, vector<1x8x256xf32>,
    return
  }
}

</mosaic_0001>

<llo_original>
// kernel: _lambda_.1
$region0: #{_lambda_.1}
  #allocation0 [shape = 'u32[]', space=smem, size = 0x4, offset = 0x4, fixed_abs, tag = 'smem constant byte address 0x4 - core index']
  #allocation1 [shape = 'u32[144,128]{1,0:T(1,128)}', space=vmem, size = 0x12000, scoped, tag = 'internal scratch']
  %s0 = inlined_call_operand.vmem [shape: f32[2,4,290], index: 0, kind: input, shape index: {}]
  %s1 = inlined_call_operand.hbm [shape: f32[36,8,1], index: 1, kind: input, shape index: {}]
  %s2 = inlined_call_operand.vmem [shape: f32[8,1], index: 2, kind: input, shape index: {}]
  %s3 = inlined_call_operand.vmem [shape: f32[2,8,256], index: 3, kind: output, shape index: {}]
  %s4 = sld [smem:[#allocation0]]
  $region26: #{_lambda_.1} parent=0
    _
  %s6 = ssub.s32 1, %s4
  %s7 = scalar_select 0, %s6, %s4
  $region1: #{_lambda_.1} parent=0
    #allocation2 [shape = 'u8[147456]{0}', space=vmem, size = 0x24000, scoped, tag = 'input window, operand 1, single buffered']
    #allocation3 [shape = 's32[1]{0}', space=sflag, size = 0x4, scoped, tag = 'scoped memory for _lambda_.1']
    %8 = vsyncpa [#allocation3], 0
    // Predicated region
    $region2: #{_lambda_.1} parent=1 // pred_check
      _
    $region3: #{_lambda_.1} parent=1 // pred_check_branch
      %10 = sbr.rel (0) target = $region5
    $region4: #{_lambda_.1} parent=1 // pred_region
      _
    $region5: #{_lambda_.1} parent=1 // pred_fallthru
      _
    // Predicated region
    $region6: #{_lambda_.1} parent=1 // pred_check
      _
    $region7: #{_lambda_.1} parent=1 // pred_check_branch
      %12 = sbr.rel (0) target = $region9
    $region8: #{_lambda_.1} parent=1 // pred_region
      %s14 = ssub.s32 4608, 4608
      %15 = vsyncadd [#allocation3], %s14
      %s16 = sshll.u32 [#allocation2], 4
      %s17 = int_to_ptr.vmem [resolvable:$true] %s16
      %22 = dma.hbm_to_vmem [thread:$0]  %s1, 4608, %s17, [#allocation3], 128, 128, 8
    $region9: #{_lambda_.1} parent=1 // pred_fallthru
      _
    // Predicated region
    $region10: #{_lambda_.1} parent=1 // pred_check
      _
    $region11: #{_lambda_.1} parent=1 // pred_check_branch
      %24 = sbr.rel (0) target = $region13
    $region12: #{_lambda_.1} parent=1 // pred_region
      _
    $region13: #{_lambda_.1} parent=1 // pred_fallthru
      _
    // Predicated region
    $region14: #{_lambda_.1} parent=1 // pred_check
      _
    $region15: #{_lambda_.1} parent=1 // pred_check_branch
      %26 = sbr.rel (0) target = $region17
    $region16: #{_lambda_.1} parent=1 // pred_region
      %27 = dma.done [#allocation3], 4608
    $region17: #{_lambda_.1} parent=1 // pred_fallthru
      _
    %v28 = vlaneseq
    %v29 = vand.u32 %v28, 127
    %v30 = vadd.s32 %v29, 128
    %vm31 = vcmp.lt.s32.totalorder %v29, 0
    %v32 = vsub.s32 0, %v29
    %v33 = vsel %vm31, %v32, %v29
    %v34 = vshrl.u32 %v33, 4
    %v35 = vand.u32 %v33, 15
    %v36 = vsub.s32 0, %v35
    %v37 = vsel %vm31, %v36, %v35
    %vm38 = vcmp.lt.s32.totalorder %v30, 0
    %v39 = vsub.s32 0, %v30
    %v40 = vsel %vm38, %v39, %v30
    %v41 = vshrl.u32 %v40, 4
    %v42 = vand.u32 %v40, 15
    %v43 = vsub.s32 0, %v42
    %v44 = vsel %vm38, %v43, %v42
    %vm45 = vcmp.ne.s32.totalorder %v37, 0
    %vm46 = vcmp.ne.s32.totalorder %v44, 0
    %vm47 = vcmp.lt.s32.totalorder %v37, 0
    %vm48 = vcmp.lt.s32.totalorder %v44, 0
    %vm49 = vmand %vm47, %vm45
    %vm50 = vmand %vm48, %vm46
    %v51 = vadd.s32 %v37, 16
    %v52 = vadd.s32 %v44, 16
    %v53 = vsel %vm49, %v51, %v37
    %v54 = vsel %vm50, %v52, %v44
    %vm55 = vcmp.ge.s32.totalorder %v53, 1
    %vm56 = vcmp.ge.s32.totalorder %v54, 1
    %vm57 = vcmp.le.s32.totalorder %v53, 14
    %vm58 = vcmp.le.s32.totalorder %v54, 14
    %v59 = vld [vmem:[%s0] sm:$0xff]
    %v60 = vsel %vm55, 1, 0
    %v61 = vsel %vm56, 1, 0
    %vm62 = vcmp.eq.s32.totalorder %v60, 1
    %vm63 = vcmp.eq.s32.totalorder %v61, 1
    %v65 = vcombine.high %v59, %v59
    %v67 = vsel %vm62, %v59, 0.0
    %v68 = vsel %vm63, %v65, 0.0
    %v69 = vld [vmem:[#allocation2] sm:$0xff]
    %71 = vset.pattern.permute.xlu0 0
    %72 = vperm.xlu0 %71, %v69
    %v73 = vpop.permute.xlu0 %72
    %v75 = vlaneseq
    %v76 = vshrl.u32 %v75, 7
    %v77 = vsub.s32 0, %v76
    %v78 = vrot.slane %v67, %v77
    %v79 = vlaneseq
    %v80 = vshrl.u32 %v79, 7
    %v81 = vsub.s32 0, %v80
    %v82 = vrot.slane %v68, %v81
    %v83 = vmul.f32 %v73, %v78
    %v84 = vmul.f32 %v73, %v82
    %v85 = vadd.f32 %v83, 0.0
    %v86 = vadd.f32 %v84, 0.0
    %s87 = scalar_lea.vmem [#allocation2], 8
    %v88 = vld [vmem:[%s87] sm:$0xff]
    %90 = vset.pattern.permute.xlu0 0
    %91 = vperm.xlu0 %90, %v88
    %v92 = vpop.permute.xlu0 %91
    %v94 = vlaneseq
    %v95 = vshrl.u32 %v94, 7
    %v96 = vsub.s32 1, %v95
    %v97 = vrot.slane %v67, %v96
    %v98 = vlaneseq
    %v99 = vshrl.u32 %v98, 7
    %v100 = vsub.s32 1, %v99
    %v101 = vrot.slane %v68, %v100
    %v102 = vmul.f32 %v92, %v97
    %v103 = vmul.f32 %v92, %v101
    %v104 = vadd.f32 %v85, %v102
    %v105 = vadd.f32 %v86, %v103
    %s106 = scalar_lea.vmem [#allocation2], 16
    %v107 = vld [vmem:[%s106] sm:$0xff]
    %109 = vset.pattern.permute.xlu0 0
    %110 = vperm.xlu0 %109, %v107
    %v111 = vpop.permute.xlu0 %110
    %v113 = vlaneseq
    %v114 = vshrl.u32 %v113, 7
    %v115 = vsub.s32 2, %v114
    %v116 = vrot.slane %v67, %v115
    %v117 = vlaneseq
    %v118 = vshrl.u32 %v117, 7
    %v119 = vsub.s32 2, %v118
    %v120 = vrot.slane %v68, %v119
    %v121 = vmul.f32 %v111, %v116
    %v122 = vmul.f32 %v111, %v120
    %v123 = vadd.f32 %v104, %v121
    %v124 = vadd.f32 %v105, %v122
    %s125 = scalar_lea.vmem [#allocation2], 24
    %v126 = vld [vmem:[%s125] sm:$0xff]
    %128 = vset.pattern.permute.xlu0 0
    %129 = vperm.xlu0 %128, %v126
    %v130 = vpop.permute.xlu0 %129
    %v132 = vlaneseq
    %v133 = vshrl.u32 %v132, 7
    %v134 = vsub.s32 3, %v133
    %v135 = vrot.slane %v67, %v134
    %v136 = vlaneseq
    %v137 = vshrl.u32 %v136, 7
    %v138 = vsub.s32 3, %v137
    %v139 = vrot.slane %v68, %v138
    %v140 = vmul.f32 %v130, %v135
    %v141 = vmul.f32 %v130, %v139
    %v142 = vadd.f32 %v123, %v140
    %v143 = vadd.f32 %v124, %v141
    %v144 = vld [vmem:[%s0] sm:$0xff]
    %v145 = vld [vmem:[%s0 + $0x8] sm:$0xf]
    %s146 = scalar_lea.vmem [#allocation2], 32
    %v147 = vld [vmem:[%s146] sm:$0xff]
    %149 = vset.pattern.permute.xlu0 0
    %150 = vperm.xlu0 %149, %v147
    %v151 = vpop.permute.xlu0 %150
    %v155 = vlaneseq
    %v156 = vshrl.u32 %v155, 7
    %v157 = vsub.s32 0, %v156
    %v158 = vrot.slane %v144, %v157
    %v159 = vlaneseq
    %v160 = vshrl.u32 %v159, 7
    %v161 = vsub.s32 4, %v160
    %v162 = vrot.slane %v144, %v161
    %v163 = vlaneseq
    %v164 = vshrl.u32 %v163, 7
    %v165 = vsub.s32 0, %v164
    %v166 = vrot.slane %v145, %v165
    %v170 = vlaneseq
    %v171 = vshrl.u32 %v170, 7
    %v172 = vsub.s32 0, %v171
    %v173 = vrot.slane %v158, %v172
    %v174 = vlaneseq
    %v175 = vshrl.u32 %v174, 7
    %v176 = vsub.s32 0, %v175
    %v177 = vrot.slane %v162, %v176
    %v178 = vlaneseq
    %v179 = vshrl.u32 %v178, 7
    %v180 = vsub.s32 0, %v179
    %v181 = vrot.slane %v166, %v180
    %v182 = vmul.f32 %v151, %v173
    %v183 = vmul.f32 %v151, %v177
    %v184 = vmul.f32 %v151, %v181
    %188 = vrot.lane.b32.xlu0 %v182, 127
    %v189 = vpop.permute.xlu0 %188
    %190 = vrot.lane.b32.xlu0 %v183, 127
    %v191 = vpop.permute.xlu0 %190
    %192 = vrot.lane.b32.xlu0 %v184, 127
    %v193 = vpop.permute.xlu0 %192
    %vm194 = vcmask 1039360
    %v195 = vsel %vm194, %v189, %v191
    %v196 = vsel %vm194, %v191, %v193
    %v199 = vadd.f32 %v142, %v195
    %v200 = vadd.f32 %v143, %v196
    %s201 = scalar_lea.vmem [#allocation2], 40
    %v202 = vld [vmem:[%s201] sm:$0xff]
    %204 = vset.pattern.permute.xlu0 0
    %205 = vperm.xlu0 %204, %v202
    %v206 = vpop.permute.xlu0 %205
    %v208 = vlaneseq
    %v209 = vshrl.u32 %v208, 7
    %v210 = vsub.s32 1, %v209
    %v211 = vrot.slane %v144, %v210
    %v212 = vlaneseq
    %v213 = vshrl.u32 %v212, 7
    %v214 = vsub.s32 5, %v213
    %v215 = vrot.slane %v144, %v214
    %v216 = vlaneseq
    %v217 = vshrl.u32 %v216, 7
    %v218 = vsub.s32 1, %v217
    %v219 = vrot.slane %v145, %v218
    %v223 = vlaneseq
    %v224 = vshrl.u32 %v223, 7
    %v225 = vsub.s32 1, %v224
    %v226 = vrot.slane %v211, %v225
    %v227 = vlaneseq
    %v228 = vshrl.u32 %v227, 7
    %v229 = vsub.s32 1, %v228
    %v230 = vrot.slane %v215, %v229
    %v231 = vlaneseq
    %v232 = vshrl.u32 %v231, 7
    %v233 = vsub.s32 1, %v232
    %v234 = vrot.slane %v219, %v233
    %v235 = vmul.f32 %v206, %v226
    %v236 = vmul.f32 %v206, %v230
    %v237 = vmul.f32 %v206, %v234
    %241 = vrot.lane.b32.xlu0 %v235, 127
    %v242 = vpop.permute.xlu0 %241
    %243 = vrot.lane.b32.xlu0 %v236, 127
    %v244 = vpop.permute.xlu0 %243
    %245 = vrot.lane.b32.xlu0 %v237, 127
    %v246 = vpop.permute.xlu0 %245
    %v247 = vsel %vm194, %v242, %v244
    %v248 = vsel %vm194, %v244, %v246
    %v251 = vadd.f32 %v199, %v247
    %v252 = vadd.f32 %v200, %v248
    %s253 = scalar_lea.vmem [#allocation2], 48
    %v254 = vld [vmem:[%s253] sm:$0xff]
    %256 = vset.pattern.permute.xlu0 0
    %257 = vperm.xlu0 %256, %v254
    %v258 = vpop.permute.xlu0 %257
    %v260 = vlaneseq
    %v261 = vshrl.u32 %v260, 7
    %v262 = vsub.s32 2, %v261
    %v263 = vrot.slane %v144, %v262
    %v264 = vlaneseq
    %v265 = vshrl.u32 %v264, 7
    %v266 = vsub.s32 6, %v265
    %v267 = vrot.slane %v144, %v266
    %v268 = vlaneseq
    %v269 = vshrl.u32 %v268, 7
    %v270 = vsub.s32 2, %v269
    %v271 = vrot.slane %v145, %v270
    %v275 = vlaneseq
    %v276 = vshrl.u32 %v275, 7
    %v277 = vsub.s32 2, %v276
    %v278 = vrot.slane %v263, %v277
    %v279 = vlaneseq
    %v280 = vshrl.u32 %v279, 7
    %v281 = vsub.s32 2, %v280
    %v282 = vrot.slane %v267, %v281
    %v283 = vlaneseq
    %v284 = vshrl.u32 %v283, 7
    %v285 = vsub.s32 2, %v284
    %v286 = vrot.slane %v271, %v285
    %v287 = vmul.f32 %v258, %v278
    %v288 = vmul.f32 %v258, %v282
    %v289 = vmul.f32 %v258, %v286
    %293 = vrot.lane.b32.xlu0 %v287, 127
    %v294 = vpop.permute.xlu0 %293
    %295 = vrot.lane.b32.xlu0 %v288, 127
    %v296 = vpop.permute.xlu0 %295
    %297 = vrot.lane.b32.xlu0 %v289, 127
    %v298 = vpop.permute.xlu0 %297
    %v299 = vsel %vm194, %v294, %v296
    %v300 = vsel %vm194, %v296, %v298
    %v303 = vadd.f32 %v251, %v299
    %v304 = vadd.f32 %v252, %v300
    %s305 = scalar_lea.vmem [#allocation2], 56
    %v306 = vld [vmem:[%s305] sm:$0xff]
    %308 = vset.pattern.permute.xlu0 0
    %309 = vperm.xlu0 %308, %v306
    %v310 = vpop.permute.xlu0 %309
    %v312 = vlaneseq
    %v313 = vshrl.u32 %v312, 7
    %v314 = vsub.s32 3, %v313
    %v315 = vrot.slane %v144, %v314
    %v316 = vlaneseq
    %v317 = vshrl.u32 %v316, 7
    %v318 = vsub.s32 7, %v317
    %v319 = vrot.slane %v144, %v318
    %v320 = vlaneseq
    %v321 = vshrl.u32 %v320, 7
    %v322 = vsub.s32 3, %v321
    %v323 = vrot.slane %v145, %v322
    %v327 = vlaneseq
    %v328 = vshrl.u32 %v327, 7
    %v329 = vsub.s32 3, %v328
    %v330 = vrot.slane %v315, %v329
    %v331 = vlaneseq
    %v332 = vshrl.u32 %v331, 7
    %v333 = vsub.s32 3, %v332
    %v334 = vrot.slane %v319, %v333
    %v335 = vlaneseq
    %v336 = vshrl.u32 %v335, 7
    %v337 = vsub.s32 3, %v336
    %v338 = vrot.slane %v323, %v337
    %v339 = vmul.f32 %v310, %v330
    %v340 = vmul.f32 %v310, %v334
    %v341 = vmul.f32 %v310, %v338
    %345 = vrot.lane.b32.xlu0 %v339, 127
    %v346 = vpop.permute.xlu0 %345
    %347 = vrot.lane.b32.xlu0 %v340, 127
    %v348 = vpop.permute.xlu0 %347
    %349 = vrot.lane.b32.xlu0 %v341, 127
    %v350 = vpop.permute.xlu0 %349
    %v351 = vsel %vm194, %v346, %v348
    %v352 = vsel %vm194, %v348, %v350
    %v355 = vadd.f32 %v303, %v351
    %v356 = vadd.f32 %v304, %v352
    %v357 = vsel %vm57, 1, 0
    %v358 = vsel %vm58, 1, 0
    %vm359 = vcmp.eq.s32.totalorder %v357, 1
    %vm360 = vcmp.eq.s32.totalorder %v358, 1
    %v361 = vcombine.high %v144, %v144
    %362 = vrot.lane.b32.xlu0 %v144, 126
    %v363 = vpop.permute.xlu0 %362
    %364 = vrot.lane.b32.xlu0 %v361, 126
    %v365 = vpop.permute.xlu0 %364
    %366 = vrot.lane.b32.xlu0 %v145, 126
    %v367 = vpop.permute.xlu0 %366
    %vm368 = vcmask 1031168
    %v369 = vsel %vm368, %v363, %v365
    %v370 = vsel %vm368, %v365, %v367
    %v373 = vsel %vm359, %v369, 0.0
    %v374 = vsel %vm360, %v370, 0.0
    %s375 = scalar_lea.vmem [#allocation2], 64
    %v376 = vld [vmem:[%s375] sm:$0xff]
    %378 = vset.pattern.permute.xlu0 0
    %379 = vperm.xlu0 %378, %v376
    %v380 = vpop.permute.xlu0 %379
    %v382 = vlaneseq
    %v383 = vshrl.u32 %v382, 7
    %v384 = vsub.s32 0, %v383
    %v385 = vrot.slane %v373, %v384
    %v386 = vlaneseq
    %v387 = vshrl.u32 %v386, 7
    %v388 = vsub.s32 0, %v387
    %v389 = vrot.slane %v374, %v388
    %v390 = vmul.f32 %v380, %v385
    %v391 = vmul.f32 %v380, %v389
    %v392 = vadd.f32 %v355, %v390
    %v393 = vadd.f32 %v356, %v391
    %s394 = scalar_lea.vmem [#allocation2], 72
    %v395 = vld [vmem:[%s394] sm:$0xff]
    %397 = vset.pattern.permute.xlu0 0
    %398 = vperm.xlu0 %397, %v395
    %v399 = vpop.permute.xlu0 %398
    %v401 = vlaneseq
    %v402 = vshrl.u32 %v401, 7
    %v403 = vsub.s32 1, %v402
    %v404 = vrot.slane %v373, %v403
    %v405 = vlaneseq
    %v406 = vshrl.u32 %v405, 7
    %v407 = vsub.s32 1, %v406
    %v408 = vrot.slane %v374, %v407
    %v409 = vmul.f32 %v399, %v404
    %v410 = vmul.f32 %v399, %v408
    %v411 = vadd.f32 %v392, %v409
    %v412 = vadd.f32 %v393, %v410
    %s413 = scalar_lea.vmem [#allocation2], 80
    %v414 = vld [vmem:[%s413] sm:$0xff]
    %416 = vset.pattern.permute.xlu0 0
    %417 = vperm.xlu0 %416, %v414
    %v418 = vpop.permute.xlu0 %417
    %v420 = vlaneseq
    %v421 = vshrl.u32 %v420, 7
    %v422 = vsub.s32 2, %v421
    %v423 = vrot.slane %v373, %v422
    %v424 = vlaneseq
    %v425 = vshrl.u32 %v424, 7
    %v426 = vsub.s32 2, %v425
    %v427 = vrot.slane %v374, %v426
    %v428 = vmul.f32 %v418, %v423
    %v429 = vmul.f32 %v418, %v427
    %v430 = vadd.f32 %v411, %v428
    %v431 = vadd.f32 %v412, %v429
    %s432 = scalar_lea.vmem [#allocation2], 88
    %v433 = vld [vmem:[%s432] sm:$0xff]
    %435 = vset.pattern.permute.xlu0 0
    %436 = vperm.xlu0 %435, %v433
    %v437 = vpop.permute.xlu0 %436
    %v439 = vlaneseq
    %v440 = vshrl.u32 %v439, 7
    %v441 = vsub.s32 3, %v440
    %v442 = vrot.slane %v373, %v441
    %v443 = vlaneseq
    %v444 = vshrl.u32 %v443, 7
    %v445 = vsub.s32 3, %v444
    %v446 = vrot.slane %v374, %v445
    %v447 = vmul.f32 %v437, %v442
    %v448 = vmul.f32 %v437, %v446
    %v449 = vadd.f32 %v430, %v447
    %v450 = vadd.f32 %v431, %v448
    %v451 = vld [vmem:[%s0] sm:$0xff]
    %v452 = vld [vmem:[%s0 + $0x8] sm:$0xf]
    %v455 = vcombine.high %v451, %v451
    %456 = vrot.lane.b32.xlu0 %v451, 112
    %v457 = vpop.permute.xlu0 %456
    %458 = vrot.lane.b32.xlu0 %v455, 112
    %v459 = vpop.permute.xlu0 %458
    %460 = vrot.lane.b32.xlu0 %v452, 112
    %v461 = vpop.permute.xlu0 %460
    %vm462 = vcmask 916480
    %v463 = vsel %vm462, %v457, %v459
    %v464 = vsel %vm462, %v459, %v461
    %v467 = vsel %vm62, %v463, 0.0
    %v468 = vsel %vm63, %v464, 0.0
    %s469 = scalar_lea.vmem [#allocation2], 96
    %v470 = vld [vmem:[%s469] sm:$0xff]
    %472 = vset.pattern.permute.xlu0 0
    %473 = vperm.xlu0 %472, %v470
    %v474 = vpop.permute.xlu0 %473
    %v476 = vlaneseq
    %v477 = vshrl.u32 %v476, 7
    %v478 = vsub.s32 0, %v477
    %v479 = vrot.slane %v467, %v478
    %v480 = vlaneseq
    %v481 = vshrl.u32 %v480, 7
    %v482 = vsub.s32 0, %v481
    %v483 = vrot.slane %v468, %v482
    %v484 = vmul.f32 %v474, %v479
    %v485 = vmul.f32 %v474, %v483
    %v486 = vadd.f32 %v449, %v484
    %v487 = vadd.f32 %v450, %v485
    %s488 = scalar_lea.vmem [#allocation2], 104
    %v489 = vld [vmem:[%s488] sm:$0xff]
    %491 = vset.pattern.permute.xlu0 0
    %492 = vperm.xlu0 %491, %v489
    %v493 = vpop.permute.xlu0 %492
    %v495 = vlaneseq
    %v496 = vshrl.u32 %v495, 7
    %v497 = vsub.s32 1, %v496
    %v498 = vrot.slane %v467, %v497
    %v499 = vlaneseq
    %v500 = vshrl.u32 %v499, 7
    %v501 = vsub.s32 1, %v500
    %v502 = vrot.slane %v468, %v501
    %v503 = vmul.f32 %v493, %v498
    %v504 = vmul.f32 %v493, %v502
    %v505 = vadd.f32 %v486, %v503
    %v506 = vadd.f32 %v487, %v504
    %s507 = scalar_lea.vmem [#allocation2], 112
    %v508 = vld [vmem:[%s507] sm:$0xff]
    %510 = vset.pattern.permute.xlu0 0
    %511 = vperm.xlu0 %510, %v508
    %v512 = vpop.permute.xlu0 %511
    %v514 = vlaneseq
    %v515 = vshrl.u32 %v514, 7
    %v516 = vsub.s32 2, %v515
    %v517 = vrot.slane %v467, %v516
    %v518 = vlaneseq
    %v519 = vshrl.u32 %v518, 7
    %v520 = vsub.s32 2, %v519
    %v521 = vrot.slane %v468, %v520
    %v522 = vmul.f32 %v512, %v517
    %v523 = vmul.f32 %v512, %v521
    %v524 = vadd.f32 %v505, %v522
    %v525 = vadd.f32 %v506, %v523
    %s526 = scalar_lea.vmem [#allocation2], 120
    %v527 = vld [vmem:[%s526] sm:$0xff]
    %529 = vset.pattern.permute.xlu0 0
    %530 = vperm.xlu0 %529, %v527
    %v531 = vpop.permute.xlu0 %530
    %v533 = vlaneseq
    %v534 = vshrl.u32 %v533, 7
    %v535 = vsub.s32 3, %v534
    %v536 = vrot.slane %v467, %v535
    %v537 = vlaneseq
    %v538 = vshrl.u32 %v537, 7
    %v539 = vsub.s32 3, %v538
    %v540 = vrot.slane %v468, %v539
    %v541 = vmul.f32 %v531, %v536
    %v542 = vmul.f32 %v531, %v540
    %v543 = vadd.f32 %v524, %v541
    %v544 = vadd.f32 %v525, %v542
    %v545 = vld [vmem:[%s0] sm:$0xff]
    %v546 = vld [vmem:[%s0 + $0x8] sm:$0xf]
    %s547 = scalar_lea.vmem [#allocation2], 128
    %v548 = vld [vmem:[%s547] sm:$0xff]
    %550 = vset.pattern.permute.xlu0 0
    %551 = vperm.xlu0 %550, %v548
    %v552 = vpop.permute.xlu0 %551
    %v556 = vlaneseq
    %v557 = vshrl.u32 %v556, 7
    %v558 = vsub.s32 0, %v557
    %v559 = vrot.slane %v545, %v558
    %v560 = vlaneseq
    %v561 = vshrl.u32 %v560, 7
    %v562 = vsub.s32 4, %v561
    %v563 = vrot.slane %v545, %v562
    %v564 = vlaneseq
    %v565 = vshrl.u32 %v564, 7
    %v566 = vsub.s32 0, %v565
    %v567 = vrot.slane %v546, %v566
    %v571 = vlaneseq
    %v572 = vshrl.u32 %v571, 7
    %v573 = vsub.s32 0, %v572
    %v574 = vrot.slane %v559, %v573
    %v575 = vlaneseq
    %v576 = vshrl.u32 %v575, 7
    %v577 = vsub.s32 0, %v576
    %v578 = vrot.slane %v563, %v577
    %v579 = vlaneseq
    %v580 = vshrl.u32 %v579, 7
    %v581 = vsub.s32 0, %v580
    %v582 = vrot.slane %v567, %v581
    %v583 = vmul.f32 %v552, %v574
    %v584 = vmul.f32 %v552, %v578
    %v585 = vmul.f32 %v552, %v582
    %589 = vrot.lane.b32.xlu0 %v583, 111
    %v590 = vpop.permute.xlu0 %589
    %591 = vrot.lane.b32.xlu0 %v584, 111
    %v592 = vpop.permute.xlu0 %591
    %593 = vrot.lane.b32.xlu0 %v585, 111
    %v594 = vpop.permute.xlu0 %593
    %vm595 = vcmask 908288
    %v596 = vsel %vm595, %v590, %v592
    %v597 = vsel %vm595, %v592, %v594
    %v600 = vadd.f32 %v543, %v596
    %v601 = vadd.f32 %v544, %v597
    %s602 = scalar_lea.vmem [#allocation2], 136
    %v603 = vld [vmem:[%s602] sm:$0xff]
    %605 = vset.pattern.permute.xlu0 0
    %606 = vperm.xlu0 %605, %v603
    %v607 = vpop.permute.xlu0 %606
    %v609 = vlaneseq
    %v610 = vshrl.u32 %v609, 7
    %v611 = vsub.s32 1, %v610
    %v612 = vrot.slane %v545, %v611
    %v613 = vlaneseq
    %v614 = vshrl.u32 %v613, 7
    %v615 = vsub.s32 5, %v614
    %v616 = vrot.slane %v545, %v615
    %v617 = vlaneseq
    %v618 = vshrl.u32 %v617, 7
    %v619 = vsub.s32 1, %v618
    %v620 = vrot.slane %v546, %v619
    %v624 = vlaneseq
    %v625 = vshrl.u32 %v624, 7
    %v626 = vsub.s32 1, %v625
    %v627 = vrot.slane %v612, %v626
    %v628 = vlaneseq
    %v629 = vshrl.u32 %v628, 7
    %v630 = vsub.s32 1, %v629
    %v631 = vrot.slane %v616, %v630
    %v632 = vlaneseq
    %v633 = vshrl.u32 %v632, 7
    %v634 = vsub.s32 1, %v633
    %v635 = vrot.slane %v620, %v634
    %v636 = vmul.f32 %v607, %v627
    %v637 = vmul.f32 %v607, %v631
    %v638 = vmul.f32 %v607, %v635
    %642 = vrot.lane.b32.xlu0 %v636, 111
    %v643 = vpop.permute.xlu0 %642
    %644 = vrot.lane.b32.xlu0 %v637, 111
    %v645 = vpop.permute.xlu0 %644
    %646 = vrot.lane.b32.xlu0 %v638, 111
    %v647 = vpop.permute.xlu0 %646
    %v648 = vsel %vm595, %v643, %v645
    %v649 = vsel %vm595, %v645, %v647
    %v652 = vadd.f32 %v600, %v648
    %v653 = vadd.f32 %v601, %v649
    %s654 = scalar_lea.vmem [#allocation2], 144
    %v655 = vld [vmem:[%s654] sm:$0xff]
    %657 = vset.pattern.permute.xlu0 0
    %658 = vperm.xlu0 %657, %v655
    %v659 = vpop.permute.xlu0 %658
    %v661 = vlaneseq
    %v662 = vshrl.u32 %v661, 7
    %v663 = vsub.s32 2, %v662
    %v664 = vrot.slane %v545, %v663
    %v665 = vlaneseq
    %v666 = vshrl.u32 %v665, 7
    %v667 = vsub.s32 6, %v666
    %v668 = vrot.slane %v545, %v667
    %v669 = vlaneseq
    %v670 = vshrl.u32 %v669, 7
    %v671 = vsub.s32 2, %v670
    %v672 = vrot.slane %v546, %v671
    %v676 = vlaneseq
    %v677 = vshrl.u32 %v676, 7
    %v678 = vsub.s32 2, %v677
    %v679 = vrot.slane %v664, %v678
    %v680 = vlaneseq
    %v681 = vshrl.u32 %v680, 7
    %v682 = vsub.s32 2, %v681
    %v683 = vrot.slane %v668, %v682
    %v684 = vlaneseq
    %v685 = vshrl.u32 %v684, 7
    %v686 = vsub.s32 2, %v685
    %v687 = vrot.slane %v672, %v686
    %v688 = vmul.f32 %v659, %v679
    %v689 = vmul.f32 %v659, %v683
    %v690 = vmul.f32 %v659, %v687
    %694 = vrot.lane.b32.xlu0 %v688, 111
    %v695 = vpop.permute.xlu0 %694
    %696 = vrot.lane.b32.xlu0 %v689, 111
    %v697 = vpop.permute.xlu0 %696
    %698 = vrot.lane.b32.xlu0 %v690, 111
    %v699 = vpop.permute.xlu0 %698
    %v700 = vsel %vm595, %v695, %v697
    %v701 = vsel %vm595, %v697, %v699
    %v704 = vadd.f32 %v652, %v700
    %v705 = vadd.f32 %v653, %v701
    %s706 = scalar_lea.vmem [#allocation2], 152
    %v707 = vld [vmem:[%s706] sm:$0xff]
    %709 = vset.pattern.permute.xlu0 0
    %710 = vperm.xlu0 %709, %v707
    %v711 = vpop.permute.xlu0 %710
    %v713 = vlaneseq
    %v714 = vshrl.u32 %v713, 7
    %v715 = vsub.s32 3, %v714
    %v716 = vrot.slane %v545, %v715
    %v717 = vlaneseq
    %v718 = vshrl.u32 %v717, 7
    %v719 = vsub.s32 7, %v718
    %v720 = vrot.slane %v545, %v719
    %v721 = vlaneseq
    %v722 = vshrl.u32 %v721, 7
    %v723 = vsub.s32 3, %v722
    %v724 = vrot.slane %v546, %v723
    %v728 = vlaneseq
    %v729 = vshrl.u32 %v728, 7
    %v730 = vsub.s32 3, %v729
    %v731 = vrot.slane %v716, %v730
    %v732 = vlaneseq
    %v733 = vshrl.u32 %v732, 7
    %v734 = vsub.s32 3, %v733
    %v735 = vrot.slane %v720, %v734
    %v736 = vlaneseq
    %v737 = vshrl.u32 %v736, 7
    %v738 = vsub.s32 3, %v737
    %v739 = vrot.slane %v724, %v738
    %v740 = vmul.f32 %v711, %v731
    %v741 = vmul.f32 %v711, %v735
    %v742 = vmul.f32 %v711, %v739
    %746 = vrot.lane.b32.xlu0 %v740, 111
    %v747 = vpop.permute.xlu0 %746
    %748 = vrot.lane.b32.xlu0 %v741, 111
    %v749 = vpop.permute.xlu0 %748
    %750 = vrot.lane.b32.xlu0 %v742, 111
    %v751 = vpop.permute.xlu0 %750
    %v752 = vsel %vm595, %v747, %v749
    %v753 = vsel %vm595, %v749, %v751
    %v756 = vadd.f32 %v704, %v752
    %v757 = vadd.f32 %v705, %v753
    %v758 = vcombine.high %v545, %v545
    %759 = vrot.lane.b32.xlu0 %v545, 110
    %v760 = vpop.permute.xlu0 %759
    %761 = vrot.lane.b32.xlu0 %v758, 110
    %v762 = vpop.permute.xlu0 %761
    %763 = vrot.lane.b32.xlu0 %v546, 110
    %v764 = vpop.permute.xlu0 %763
    %vm765 = vcmask 900096
    %v766 = vsel %vm765, %v760, %v762
    %v767 = vsel %vm765, %v762, %v764
    %v770 = vsel %vm359, %v766, 0.0
    %v771 = vsel %vm360, %v767, 0.0
    %s772 = scalar_lea.vmem [#allocation2], 160
    %v773 = vld [vmem:[%s772] sm:$0xff]
    %775 = vset.pattern.permute.xlu0 0
    %776 = vperm.xlu0 %775, %v773
    %v777 = vpop.permute.xlu0 %776
    %v779 = vlaneseq
    %v780 = vshrl.u32 %v779, 7
    %v781 = vsub.s32 0, %v780
    %v782 = vrot.slane %v770, %v781
    %v783 = vlaneseq
    %v784 = vshrl.u32 %v783, 7
    %v785 = vsub.s32 0, %v784
    %v786 = vrot.slane %v771, %v785
    %v787 = vmul.f32 %v777, %v782
    %v788 = vmul.f32 %v777, %v786
    %v789 = vadd.f32 %v756, %v787
    %v790 = vadd.f32 %v757, %v788
    %s791 = scalar_lea.vmem [#allocation2], 168
    %v792 = vld [vmem:[%s791] sm:$0xff]
    %794 = vset.pattern.permute.xlu0 0
    %795 = vperm.xlu0 %794, %v792
    %v796 = vpop.permute.xlu0 %795
    %v798 = vlaneseq
    %v799 = vshrl.u32 %v798, 7
    %v800 = vsub.s32 1, %v799
    %v801 = vrot.slane %v770, %v800
    %v802 = vlaneseq
    %v803 = vshrl.u32 %v802, 7
    %v804 = vsub.s32 1, %v803
    %v805 = vrot.slane %v771, %v804
    %v806 = vmul.f32 %v796, %v801
    %v807 = vmul.f32 %v796, %v805
    %v808 = vadd.f32 %v789, %v806
    %v809 = vadd.f32 %v790, %v807
    %s810 = scalar_lea.vmem [#allocation2], 176
    %v811 = vld [vmem:[%s810] sm:$0xff]
    %813 = vset.pattern.permute.xlu0 0
    %814 = vperm.xlu0 %813, %v811
    %v815 = vpop.permute.xlu0 %814
    %v817 = vlaneseq
    %v818 = vshrl.u32 %v817, 7
    %v819 = vsub.s32 2, %v818
    %v820 = vrot.slane %v770, %v819
    %v821 = vlaneseq
    %v822 = vshrl.u32 %v821, 7
    %v823 = vsub.s32 2, %v822
    %v824 = vrot.slane %v771, %v823
    %v825 = vmul.f32 %v815, %v820
    %v826 = vmul.f32 %v815, %v824
    %v827 = vadd.f32 %v808, %v825
    %v828 = vadd.f32 %v809, %v826
    %s829 = scalar_lea.vmem [#allocation2], 184
    %v830 = vld [vmem:[%s829] sm:$0xff]
    %832 = vset.pattern.permute.xlu0 0
    %833 = vperm.xlu0 %832, %v830
    %v834 = vpop.permute.xlu0 %833
    %v836 = vlaneseq
    %v837 = vshrl.u32 %v836, 7
    %v838 = vsub.s32 3, %v837
    %v839 = vrot.slane %v770, %v838
    %v840 = vlaneseq
    %v841 = vshrl.u32 %v840, 7
    %v842 = vsub.s32 3, %v841
    %v843 = vrot.slane %v771, %v842
    %v844 = vmul.f32 %v834, %v839
    %v845 = vmul.f32 %v834, %v843
    %v846 = vadd.f32 %v827, %v844
    %v847 = vadd.f32 %v828, %v845
    %v848 = vld [vmem:[%s0] sm:$0xff]
    %v849 = vld [vmem:[%s0 + $0x8] sm:$0xf]
    %v852 = vcombine.high %v848, %v848
    %853 = vrot.lane.b32.xlu0 %v848, 96
    %v854 = vpop.permute.xlu0 %853
    %855 = vrot.lane.b32.xlu0 %v852, 96
    %v856 = vpop.permute.xlu0 %855
    %857 = vrot.lane.b32.xlu0 %v849, 96
    %v858 = vpop.permute.xlu0 %857
    %vm859 = vcmask 785408
    %v860 = vsel %vm859, %v854, %v856
    %v861 = vsel %vm859, %v856, %v858
    %v864 = vsel %vm62, %v860, 0.0
    %v865 = vsel %vm63, %v861, 0.0
    %s866 = scalar_lea.vmem [#allocation2], 192
    %v867 = vld [vmem:[%s866] sm:$0xff]
    %869 = vset.pattern.permute.xlu0 0
    %870 = vperm.xlu0 %869, %v867
    %v871 = vpop.permute.xlu0 %870
    %v873 = vlaneseq
    %v874 = vshrl.u32 %v873, 7
    %v875 = vsub.s32 0, %v874
    %v876 = vrot.slane %v864, %v875
    %v877 = vlaneseq
    %v878 = vshrl.u32 %v877, 7
    %v879 = vsub.s32 0, %v878
    %v880 = vrot.slane %v865, %v879
    %v881 = vmul.f32 %v871, %v876
    %v882 = vmul.f32 %v871, %v880
    %v883 = vadd.f32 %v846, %v881
    %v884 = vadd.f32 %v847, %v882
    %s885 = scalar_lea.vmem [#allocation2], 200
    %v886 = vld [vmem:[%s885] sm:$0xff]
    %888 = vset.pattern.permute.xlu0 0
    %889 = vperm.xlu0 %888, %v886
    %v890 = vpop.permute.xlu0 %889
    %v892 = vlaneseq
    %v893 = vshrl.u32 %v892, 7
    %v894 = vsub.s32 1, %v893
    %v895 = vrot.slane %v864, %v894
    %v896 = vlaneseq
    %v897 = vshrl.u32 %v896, 7
    %v898 = vsub.s32 1, %v897
    %v899 = vrot.slane %v865, %v898
    %v900 = vmul.f32 %v890, %v895
    %v901 = vmul.f32 %v890, %v899
    %v902 = vadd.f32 %v883, %v900
    %v903 = vadd.f32 %v884, %v901
    %s904 = scalar_lea.vmem [#allocation2], 208
    %v905 = vld [vmem:[%s904] sm:$0xff]
    %907 = vset.pattern.permute.xlu0 0
    %908 = vperm.xlu0 %907, %v905
    %v909 = vpop.permute.xlu0 %908
    %v911 = vlaneseq
    %v912 = vshrl.u32 %v911, 7
    %v913 = vsub.s32 2, %v912
    %v914 = vrot.slane %v864, %v913
    %v915 = vlaneseq
    %v916 = vshrl.u32 %v915, 7
    %v917 = vsub.s32 2, %v916
    %v918 = vrot.slane %v865, %v917
    %v919 = vmul.f32 %v909, %v914
    %v920 = vmul.f32 %v909, %v918
    %v921 = vadd.f32 %v902, %v919
    %v922 = vadd.f32 %v903, %v920
    %s923 = scalar_lea.vmem [#allocation2], 216
    %v924 = vld [vmem:[%s923] sm:$0xff]
    %926 = vset.pattern.permute.xlu0 0
    %927 = vperm.xlu0 %926, %v924
    %v928 = vpop.permute.xlu0 %927
    %v930 = vlaneseq
    %v931 = vshrl.u32 %v930, 7
    %v932 = vsub.s32 3, %v931
    %v933 = vrot.slane %v864, %v932
    %v934 = vlaneseq
    %v935 = vshrl.u32 %v934, 7
    %v936 = vsub.s32 3, %v935
    %v937 = vrot.slane %v865, %v936
    %v938 = vmul.f32 %v928, %v933
    %v939 = vmul.f32 %v928, %v937
    %v940 = vadd.f32 %v921, %v938
    %v941 = vadd.f32 %v922, %v939
    %v942 = vld [vmem:[%s0] sm:$0xff]
    %v943 = vld [vmem:[%s0 + $0x8] sm:$0xf]
    %s944 = scalar_lea.vmem [#allocation2], 224
    %v945 = vld [vmem:[%s944] sm:$0xff]
    %947 = vset.pattern.permute.xlu0 0
    %948 = vperm.xlu0 %947, %v945
    %v949 = vpop.permute.xlu0 %948
    %v953 = vlaneseq
    %v954 = vshrl.u32 %v953, 7
    %v955 = vsub.s32 0, %v954
    %v956 = vrot.slane %v942, %v955
    %v957 = vlaneseq
    %v958 = vshrl.u32 %v957, 7
    %v959 = vsub.s32 4, %v958
    %v960 = vrot.slane %v942, %v959
    %v961 = vlaneseq
    %v962 = vshrl.u32 %v961, 7
    %v963 = vsub.s32 0, %v962
    %v964 = vrot.slane %v943, %v963
    %v968 = vlaneseq
    %v969 = vshrl.u32 %v968, 7
    %v970 = vsub.s32 0, %v969
    %v971 = vrot.slane %v956, %v970
    %v972 = vlaneseq
    %v973 = vshrl.u32 %v972, 7
    %v974 = vsub.s32 0, %v973
    %v975 = vrot.slane %v960, %v974
    %v976 = vlaneseq
    %v977 = vshrl.u32 %v976, 7
    %v978 = vsub.s32 0, %v977
    %v979 = vrot.slane %v964, %v978
    %v980 = vmul.f32 %v949, %v971
    %v981 = vmul.f32 %v949, %v975
    %v982 = vmul.f32 %v949, %v979
    %986 = vrot.lane.b32.xlu0 %v980, 95
    %v987 = vpop.permute.xlu0 %986
    %988 = vrot.lane.b32.xlu0 %v981, 95
    %v989 = vpop.permute.xlu0 %988
    %990 = vrot.lane.b32.xlu0 %v982, 95
    %v991 = vpop.permute.xlu0 %990
    %vm992 = vcmask 777216
    %v993 = vsel %vm992, %v987, %v989
    %v994 = vsel %vm992, %v989, %v991
    %v997 = vadd.f32 %v940, %v993
    %v998 = vadd.f32 %v941, %v994
    %s999 = scalar_lea.vmem [#allocation2], 232
    %v1000 = vld [vmem:[%s999] sm:$0xff]
    %1002 = vset.pattern.permute.xlu0 0
    %1003 = vperm.xlu0 %1002, %v1000
    %v1004 = vpop.permute.xlu0 %1003
    %v1006 = vlaneseq
    %v1007 = vshrl.u32 %v1006, 7
    %v1008 = vsub.s32 1, %v1007
    %v1009 = vrot.slane %v942, %v1008
    %v1010 = vlaneseq
    %v1011 = vshrl.u32 %v1010, 7
    %v1012 = vsub.s32 5, %v1011
    %v1013 = vrot.slane %v942, %v1012
    %v1014 = vlaneseq
    %v1015 = vshrl.u32 %v1014, 7
    %v1016 = vsub.s32 1, %v1015
    %v1017 = vrot.slane %v943, %v1016
    %v1021 = vlaneseq
    %v1022 = vshrl.u32 %v1021, 7
    %v1023 = vsub.s32 1, %v1022
    %v1024 = vrot.slane %v1009, %v1023
    %v1025 = vlaneseq
    %v1026 = vshrl.u32 %v1025, 7
    %v1027 = vsub.s32 1, %v1026
    %v1028 = vrot.slane %v1013, %v1027
    %v1029 = vlaneseq
    %v1030 = vshrl.u32 %v1029, 7
    %v1031 = vsub.s32 1, %v1030
    %v1032 = vrot.slane %v1017, %v1031
    %v1033 = vmul.f32 %v1004, %v1024
    %v1034 = vmul.f32 %v1004, %v1028
    %v1035 = vmul.f32 %v1004, %v1032
    %1039 = vrot.lane.b32.xlu0 %v1033, 95
    %v1040 = vpop.permute.xlu0 %1039
    %1041 = vrot.lane.b32.xlu0 %v1034, 95
    %v1042 = vpop.permute.xlu0 %1041
    %1043 = vrot.lane.b32.xlu0 %v1035, 95
    %v1044 = vpop.permute.xlu0 %1043
    %v1045 = vsel %vm992, %v1040, %v1042
    %v1046 = vsel %vm992, %v1042, %v1044
    %v1049 = vadd.f32 %v997, %v1045
    %v1050 = vadd.f32 %v998, %v1046
    %s1051 = scalar_lea.vmem [#allocation2], 240
    %v1052 = vld [vmem:[%s1051] sm:$0xff]
    %1054 = vset.pattern.permute.xlu0 0
    %1055 = vperm.xlu0 %1054, %v1052
    %v1056 = vpop.permute.xlu0 %1055
    %v1058 = vlaneseq
    %v1059 = vshrl.u32 %v1058, 7
    %v1060 = vsub.s32 2, %v1059
    %v1061 = vrot.slane %v942, %v1060
    %v1062 = vlaneseq
    %v1063 = vshrl.u32 %v1062, 7
    %v1064 = vsub.s32 6, %v1063
    %v1065 = vrot.slane %v942, %v1064
    %v1066 = vlaneseq
    %v1067 = vshrl.u32 %v1066, 7
    %v1068 = vsub.s32 2, %v1067
    %v1069 = vrot.slane %v943, %v1068
    %v1073 = vlaneseq
    %v1074 = vshrl.u32 %v1073, 7
    %v1075 = vsub.s32 2, %v1074
    %v1076 = vrot.slane %v1061, %v1075
    %v1077 = vlaneseq
    %v1078 = vshrl.u32 %v1077, 7
    %v1079 = vsub.s32 2, %v1078
    %v1080 = vrot.slane %v1065, %v1079
    %v1081 = vlaneseq
    %v1082 = vshrl.u32 %v1081, 7
    %v1083 = vsub.s32 2, %v1082
    %v1084 = vrot.slane %v1069, %v1083
    %v1085 = vmul.f32 %v1056, %v1076
    %v1086 = vmul.f32 %v1056, %v1080
    %v1087 = vmul.f32 %v1056, %v1084
    %1091 = vrot.lane.b32.xlu0 %v1085, 95
    %v1092 = vpop.permute.xlu0 %1091
    %1093 = vrot.lane.b32.xlu0 %v1086, 95
    %v1094 = vpop.permute.xlu0 %1093
    %1095 = vrot.lane.b32.xlu0 %v1087, 95
    %v1096 = vpop.permute.xlu0 %1095
    %v1097 = vsel %vm992, %v1092, %v1094
    %v1098 = vsel %vm992, %v1094, %v1096
    %v1101 = vadd.f32 %v1049, %v1097
    %v1102 = vadd.f32 %v1050, %v1098
    %s1103 = scalar_lea.vmem [#allocation2], 248
    %v1104 = vld [vmem:[%s1103] sm:$0xff]
    %1106 = vset.pattern.permute.xlu0 0
    %1107 = vperm.xlu0 %1106, %v1104
    %v1108 = vpop.permute.xlu0 %1107
    %v1110 = vlaneseq
    %v1111 = vshrl.u32 %v1110, 7
    %v1112 = vsub.s32 3, %v1111
    %v1113 = vrot.slane %v942, %v1112
    %v1114 = vlaneseq
    %v1115 = vshrl.u32 %v1114, 7
    %v1116 = vsub.s32 7, %v1115
    %v1117 = vrot.slane %v942, %v1116
    %v1118 = vlaneseq
    %v1119 = vshrl.u32 %v1118, 7
    %v1120 = vsub.s32 3, %v1119
    %v1121 = vrot.slane %v943, %v1120
    %v1125 = vlaneseq
    %v1126 = vshrl.u32 %v1125, 7
    %v1127 = vsub.s32 3, %v1126
    %v1128 = vrot.slane %v1113, %v1127
    %v1129 = vlaneseq
    %v1130 = vshrl.u32 %v1129, 7
    %v1131 = vsub.s32 3, %v1130
    %v1132 = vrot.slane %v1117, %v1131
    %v1133 = vlaneseq
    %v1134 = vshrl.u32 %v1133, 7
    %v1135 = vsub.s32 3, %v1134
    %v1136 = vrot.slane %v1121, %v1135
    %v1137 = vmul.f32 %v1108, %v1128
    %v1138 = vmul.f32 %v1108, %v1132
    %v1139 = vmul.f32 %v1108, %v1136
    %1143 = vrot.lane.b32.xlu0 %v1137, 95
    %v1144 = vpop.permute.xlu0 %1143
    %1145 = vrot.lane.b32.xlu0 %v1138, 95
    %v1146 = vpop.permute.xlu0 %1145
    %1147 = vrot.lane.b32.xlu0 %v1139, 95
    %v1148 = vpop.permute.xlu0 %1147
    %v1149 = vsel %vm992, %v1144, %v1146
    %v1150 = vsel %vm992, %v1146, %v1148
    %v1153 = vadd.f32 %v1101, %v1149
    %v1154 = vadd.f32 %v1102, %v1150
    %v1155 = vcombine.high %v942, %v942
    %1156 = vrot.lane.b32.xlu0 %v942, 94
    %v1157 = vpop.permute.xlu0 %1156
    %1158 = vrot.lane.b32.xlu0 %v1155, 94
    %v1159 = vpop.permute.xlu0 %1158
    %1160 = vrot.lane.b32.xlu0 %v943, 94
    %v1161 = vpop.permute.xlu0 %1160
    %vm1162 = vcmask 769024
    %v1163 = vsel %vm1162, %v1157, %v1159
    %v1164 = vsel %vm1162, %v1159, %v1161
    %v1167 = vsel %vm359, %v1163, 0.0
    %v1168 = vsel %vm360, %v1164, 0.0
    %s1169 = scalar_lea.vmem [#allocation2], 256
    %v1170 = vld [vmem:[%s1169] sm:$0xff]
    %1172 = vset.pattern.permute.xlu0 0
    %1173 = vperm.xlu0 %1172, %v1170
    %v1174 = vpop.permute.xlu0 %1173
    %v1176 = vlaneseq
    %v1177 = vshrl.u32 %v1176, 7
    %v1178 = vsub.s32 0, %v1177
    %v1179 = vrot.slane %v1167, %v1178
    %v1180 = vlaneseq
    %v1181 = vshrl.u32 %v1180, 7
    %v1182 = vsub.s32 0, %v1181
    %v1183 = vrot.slane %v1168, %v1182
    %v1184 = vmul.f32 %v1174, %v1179
    %v1185 = vmul.f32 %v1174, %v1183
    %v1186 = vadd.f32 %v1153, %v1184
    %v1187 = vadd.f32 %v1154, %v1185
    %s1188 = scalar_lea.vmem [#allocation2], 264
    %v1189 = vld [vmem:[%s1188] sm:$0xff]
    %1191 = vset.pattern.permute.xlu0 0
    %1192 = vperm.xlu0 %1191, %v1189
    %v1193 = vpop.permute.xlu0 %1192
    %v1195 = vlaneseq
    %v1196 = vshrl.u32 %v1195, 7
    %v1197 = vsub.s32 1, %v1196
    %v1198 = vrot.slane %v1167, %v1197
    %v1199 = vlaneseq
    %v1200 = vshrl.u32 %v1199, 7
    %v1201 = vsub.s32 1, %v1200
    %v1202 = vrot.slane %v1168, %v1201
    %v1203 = vmul.f32 %v1193, %v1198
    %v1204 = vmul.f32 %v1193, %v1202
    %v1205 = vadd.f32 %v1186, %v1203
    %v1206 = vadd.f32 %v1187, %v1204
    %s1207 = scalar_lea.vmem [#allocation2], 272
    %v1208 = vld [vmem:[%s1207] sm:$0xff]
    %1210 = vset.pattern.permute.xlu0 0
    %1211 = vperm.xlu0 %1210, %v1208
    %v1212 = vpop.permute.xlu0 %1211
    %v1214 = vlaneseq
    %v1215 = vshrl.u32 %v1214, 7
    %v1216 = vsub.s32 2, %v1215
    %v1217 = vrot.slane %v1167, %v1216
    %v1218 = vlaneseq
    %v1219 = vshrl.u32 %v1218, 7
    %v1220 = vsub.s32 2, %v1219
    %v1221 = vrot.slane %v1168, %v1220
    %v1222 = vmul.f32 %v1212, %v1217
    %v1223 = vmul.f32 %v1212, %v1221
    %v1224 = vadd.f32 %v1205, %v1222
    %v1225 = vadd.f32 %v1206, %v1223
    %s1226 = scalar_lea.vmem [#allocation2], 280
    %v1227 = vld [vmem:[%s1226] sm:$0xff]
    %1229 = vset.pattern.permute.xlu0 0
    %1230 = vperm.xlu0 %1229, %v1227
    %v1231 = vpop.permute.xlu0 %1230
    %v1233 = vlaneseq
    %v1234 = vshrl.u32 %v1233, 7
    %v1235 = vsub.s32 3, %v1234
    %v1236 = vrot.slane %v1167, %v1235
    %v1237 = vlaneseq
    %v1238 = vshrl.u32 %v1237, 7
    %v1239 = vsub.s32 3, %v1238
    %v1240 = vrot.slane %v1168, %v1239
    %v1241 = vmul.f32 %v1231, %v1236
    %v1242 = vmul.f32 %v1231, %v1240
    %v1243 = vadd.f32 %v1224, %v1241
    %v1244 = vadd.f32 %v1225, %v1242
    %v1245 = vld [vmem:[%s2] sm:$0xff]
    %1247 = vset.pattern.permute.xlu0 0
    %1248 = vperm.xlu0 %1247, %v1245
    %v1249 = vpop.permute.xlu0 %1248
    %v1251 = vadd.f32 %v1243, %v1249
    %v1252 = vadd.f32 %v1244, %v1249
    %1253 = vst [vmem:[%s3] sm:$0xff] %v1251
    %1254 = vst [vmem:[%s3 + $0x8] sm:$0xff] %v1252
    %s1255 = scalar_lea.vmem %s0, 12
    %v1256 = vld [vmem:[%s1255] sm:$0xff]
    %v1258 = vcombine.high %v1256, %v1256
    %v1260 = vsel %vm62, %v1256, 0.0
    %v1261 = vsel %vm63, %v1258, 0.0
    %v1262 = vld [vmem:[#allocation2] sm:$0xff]
    %1264 = vset.pattern.permute.xlu0 0
    %1265 = vperm.xlu0 %1264, %v1262
    %v1266 = vpop.permute.xlu0 %1265
    %v1268 = vlaneseq
    %v1269 = vshrl.u32 %v1268, 7
    %v1270 = vsub.s32 0, %v1269
    %v1271 = vrot.slane %v1260, %v1270
    %v1272 = vlaneseq
    %v1273 = vshrl.u32 %v1272, 7
    %v1274 = vsub.s32 0, %v1273
    %v1275 = vrot.slane %v1261, %v1274
    %v1276 = vmul.f32 %v1266, %v1271
    %v1277 = vmul.f32 %v1266, %v1275
    %v1278 = vadd.f32 %v1276, 0.0
    %v1279 = vadd.f32 %v1277, 0.0
    %v1280 = vld [vmem:[%s87] sm:$0xff]
    %1282 = vset.pattern.permute.xlu0 0
    %1283 = vperm.xlu0 %1282, %v1280
    %v1284 = vpop.permute.xlu0 %1283
    %v1286 = vlaneseq
    %v1287 = vshrl.u32 %v1286, 7
    %v1288 = vsub.s32 1, %v1287
    %v1289 = vrot.slane %v1260, %v1288
    %v1290 = vlaneseq
    %v1291 = vshrl.u32 %v1290, 7
    %v1292 = vsub.s32 1, %v1291
    %v1293 = vrot.slane %v1261, %v1292
    %v1294 = vmul.f32 %v1284, %v1289
    %v1295 = vmul.f32 %v1284, %v1293
    %v1296 = vadd.f32 %v1278, %v1294
    %v1297 = vadd.f32 %v1279, %v1295
    %v1298 = vld [vmem:[%s106] sm:$0xff]
    %1300 = vset.pattern.permute.xlu0 0
    %1301 = vperm.xlu0 %1300, %v1298
    %v1302 = vpop.permute.xlu0 %1301
    %v1304 = vlaneseq
    %v1305 = vshrl.u32 %v1304, 7
    %v1306 = vsub.s32 2, %v1305
    %v1307 = vrot.slane %v1260, %v1306
    %v1308 = vlaneseq
    %v1309 = vshrl.u32 %v1308, 7
    %v1310 = vsub.s32 2, %v1309
    %v1311 = vrot.slane %v1261, %v1310
    %v1312 = vmul.f32 %v1302, %v1307
    %v1313 = vmul.f32 %v1302, %v1311
    %v1314 = vadd.f32 %v1296, %v1312
    %v1315 = vadd.f32 %v1297, %v1313
    %v1316 = vld [vmem:[%s125] sm:$0xff]
    %1318 = vset.pattern.permute.xlu0 0
    %1319 = vperm.xlu0 %1318, %v1316
    %v1320 = vpop.permute.xlu0 %1319
    %v1322 = vlaneseq
    %v1323 = vshrl.u32 %v1322, 7
    %v1324 = vsub.s32 3, %v1323
    %v1325 = vrot.slane %v1260, %v1324
    %v1326 = vlaneseq
    %v1327 = vshrl.u32 %v1326, 7
    %v1328 = vsub.s32 3, %v1327
    %v1329 = vrot.slane %v1261, %v1328
    %v1330 = vmul.f32 %v1320, %v1325
    %v1331 = vmul.f32 %v1320, %v1329
    %v1332 = vadd.f32 %v1314, %v1330
    %v1333 = vadd.f32 %v1315, %v1331
    %v1334 = vld [vmem:[%s1255] sm:$0xff]
    %v1335 = vld [vmem:[%s1255 + $0x8] sm:$0xf]
    %v1336 = vld [vmem:[%s146] sm:$0xff]
    %1338 = vset.pattern.permute.xlu0 0
    %1339 = vperm.xlu0 %1338, %v1336
    %v1340 = vpop.permute.xlu0 %1339
    %v1344 = vlaneseq
    %v1345 = vshrl.u32 %v1344, 7
    %v1346 = vsub.s32 0, %v1345
    %v1347 = vrot.slane %v1334, %v1346
    %v1348 = vlaneseq
    %v1349 = vshrl.u32 %v1348, 7
    %v1350 = vsub.s32 4, %v1349
    %v1351 = vrot.slane %v1334, %v1350
    %v1352 = vlaneseq
    %v1353 = vshrl.u32 %v1352, 7
    %v1354 = vsub.s32 0, %v1353
    %v1355 = vrot.slane %v1335, %v1354
    %v1359 = vlaneseq
    %v1360 = vshrl.u32 %v1359, 7
    %v1361 = vsub.s32 0, %v1360
    %v1362 = vrot.slane %v1347, %v1361
    %v1363 = vlaneseq
    %v1364 = vshrl.u32 %v1363, 7
    %v1365 = vsub.s32 0, %v1364
    %v1366 = vrot.slane %v1351, %v1365
    %v1367 = vlaneseq
    %v1368 = vshrl.u32 %v1367, 7
    %v1369 = vsub.s32 0, %v1368
    %v1370 = vrot.slane %v1355, %v1369
    %v1371 = vmul.f32 %v1340, %v1362
    %v1372 = vmul.f32 %v1340, %v1366
    %v1373 = vmul.f32 %v1340, %v1370
    %1377 = vrot.lane.b32.xlu0 %v1371, 127
    %v1378 = vpop.permute.xlu0 %1377
    %1379 = vrot.lane.b32.xlu0 %v1372, 127
    %v1380 = vpop.permute.xlu0 %1379
    %1381 = vrot.lane.b32.xlu0 %v1373, 127
    %v1382 = vpop.permute.xlu0 %1381
    %v1383 = vsel %vm194, %v1378, %v1380
    %v1384 = vsel %vm194, %v1380, %v1382
    %v1387 = vadd.f32 %v1332, %v1383
    %v1388 = vadd.f32 %v1333, %v1384
    %v1389 = vld [vmem:[%s201] sm:$0xff]
    %1391 = vset.pattern.permute.xlu0 0
    %1392 = vperm.xlu0 %1391, %v1389
    %v1393 = vpop.permute.xlu0 %1392
    %v1395 = vlaneseq
    %v1396 = vshrl.u32 %v1395, 7
    %v1397 = vsub.s32 1, %v1396
    %v1398 = vrot.slane %v1334, %v1397
    %v1399 = vlaneseq
    %v1400 = vshrl.u32 %v1399, 7
    %v1401 = vsub.s32 5, %v1400
    %v1402 = vrot.slane %v1334, %v1401
    %v1403 = vlaneseq
    %v1404 = vshrl.u32 %v1403, 7
    %v1405 = vsub.s32 1, %v1404
    %v1406 = vrot.slane %v1335, %v1405
    %v1410 = vlaneseq
    %v1411 = vshrl.u32 %v1410, 7
    %v1412 = vsub.s32 1, %v1411
    %v1413 = vrot.slane %v1398, %v1412
    %v1414 = vlaneseq
    %v1415 = vshrl.u32 %v1414, 7
    %v1416 = vsub.s32 1, %v1415
    %v1417 = vrot.slane %v1402, %v1416
    %v1418 = vlaneseq
    %v1419 = vshrl.u32 %v1418, 7
    %v1420 = vsub.s32 1, %v1419
    %v1421 = vrot.slane %v1406, %v1420
    %v1422 = vmul.f32 %v1393, %v1413
    %v1423 = vmul.f32 %v1393, %v1417
    %v1424 = vmul.f32 %v1393, %v1421
    %1428 = vrot.lane.b32.xlu0 %v1422, 127
    %v1429 = vpop.permute.xlu0 %1428
    %1430 = vrot.lane.b32.xlu0 %v1423, 127
    %v1431 = vpop.permute.xlu0 %1430
    %1432 = vrot.lane.b32.xlu0 %v1424, 127
    %v1433 = vpop.permute.xlu0 %1432
    %v1434 = vsel %vm194, %v1429, %v1431
    %v1435 = vsel %vm194, %v1431, %v1433
    %v1438 = vadd.f32 %v1387, %v1434
    %v1439 = vadd.f32 %v1388, %v1435
    %v1440 = vld [vmem:[%s253] sm:$0xff]
    %1442 = vset.pattern.permute.xlu0 0
    %1443 = vperm.xlu0 %1442, %v1440
    %v1444 = vpop.permute.xlu0 %1443
    %v1446 = vlaneseq
    %v1447 = vshrl.u32 %v1446, 7
    %v1448 = vsub.s32 2, %v1447
    %v1449 = vrot.slane %v1334, %v1448
    %v1450 = vlaneseq
    %v1451 = vshrl.u32 %v1450, 7
    %v1452 = vsub.s32 6, %v1451
    %v1453 = vrot.slane %v1334, %v1452
    %v1454 = vlaneseq
    %v1455 = vshrl.u32 %v1454, 7
    %v1456 = vsub.s32 2, %v1455
    %v1457 = vrot.slane %v1335, %v1456
    %v1461 = vlaneseq
    %v1462 = vshrl.u32 %v1461, 7
    %v1463 = vsub.s32 2, %v1462
    %v1464 = vrot.slane %v1449, %v1463
    %v1465 = vlaneseq
    %v1466 = vshrl.u32 %v1465, 7
    %v1467 = vsub.s32 2, %v1466
    %v1468 = vrot.slane %v1453, %v1467
    %v1469 = vlaneseq
    %v1470 = vshrl.u32 %v1469, 7
    %v1471 = vsub.s32 2, %v1470
    %v1472 = vrot.slane %v1457, %v1471
    %v1473 = vmul.f32 %v1444, %v1464
    %v1474 = vmul.f32 %v1444, %v1468
    %v1475 = vmul.f32 %v1444, %v1472
    %1479 = vrot.lane.b32.xlu0 %v1473, 127
    %v1480 = vpop.permute.xlu0 %1479
    %1481 = vrot.lane.b32.xlu0 %v1474, 127
    %v1482 = vpop.permute.xlu0 %1481
    %1483 = vrot.lane.b32.xlu0 %v1475, 127
    %v1484 = vpop.permute.xlu0 %1483
    %v1485 = vsel %vm194, %v1480, %v1482
    %v1486 = vsel %vm194, %v1482, %v1484
    %v1489 = vadd.f32 %v1438, %v1485
    %v1490 = vadd.f32 %v1439, %v1486
    %v1491 = vld [vmem:[%s305] sm:$0xff]
    %1493 = vset.pattern.permute.xlu0 0
    %1494 = vperm.xlu0 %1493, %v1491
    %v1495 = vpop.permute.xlu0 %1494
    %v1497 = vlaneseq
    %v1498 = vshrl.u32 %v1497, 7
    %v1499 = vsub.s32 3, %v1498
    %v1500 = vrot.slane %v1334, %v1499
    %v1501 = vlaneseq
    %v1502 = vshrl.u32 %v1501, 7
    %v1503 = vsub.s32 7, %v1502
    %v1504 = vrot.slane %v1334, %v1503
    %v1505 = vlaneseq
    %v1506 = vshrl.u32 %v1505, 7
    %v1507 = vsub.s32 3, %v1506
    %v1508 = vrot.slane %v1335, %v1507
    %v1512 = vlaneseq
    %v1513 = vshrl.u32 %v1512, 7
    %v1514 = vsub.s32 3, %v1513
    %v1515 = vrot.slane %v1500, %v1514
    %v1516 = vlaneseq
    %v1517 = vshrl.u32 %v1516, 7
    %v1518 = vsub.s32 3, %v1517
    %v1519 = vrot.slane %v1504, %v1518
    %v1520 = vlaneseq
    %v1521 = vshrl.u32 %v1520, 7
    %v1522 = vsub.s32 3, %v1521
    %v1523 = vrot.slane %v1508, %v1522
    %v1524 = vmul.f32 %v1495, %v1515
    %v1525 = vmul.f32 %v1495, %v1519
    %v1526 = vmul.f32 %v1495, %v1523
    %1530 = vrot.lane.b32.xlu0 %v1524, 127
    %v1531 = vpop.permute.xlu0 %1530
    %1532 = vrot.lane.b32.xlu0 %v1525, 127
    %v1533 = vpop.permute.xlu0 %1532
    %1534 = vrot.lane.b32.xlu0 %v1526, 127
    %v1535 = vpop.permute.xlu0 %1534
    %v1536 = vsel %vm194, %v1531, %v1533
    %v1537 = vsel %vm194, %v1533, %v1535
    %v1540 = vadd.f32 %v1489, %v1536
    %v1541 = vadd.f32 %v1490, %v1537
    %v1542 = vcombine.high %v1334, %v1334
    %1543 = vrot.lane.b32.xlu0 %v1334, 126
    %v1544 = vpop.permute.xlu0 %1543
    %1545 = vrot.lane.b32.xlu0 %v1542, 126
    %v1546 = vpop.permute.xlu0 %1545
    %1547 = vrot.lane.b32.xlu0 %v1335, 126
    %v1548 = vpop.permute.xlu0 %1547
    %v1549 = vsel %vm368, %v1544, %v1546
    %v1550 = vsel %vm368, %v1546, %v1548
    %v1553 = vsel %vm359, %v1549, 0.0
    %v1554 = vsel %vm360, %v1550, 0.0
    %v1555 = vld [vmem:[%s375] sm:$0xff]
    %1557 = vset.pattern.permute.xlu0 0
    %1558 = vperm.xlu0 %1557, %v1555
    %v1559 = vpop.permute.xlu0 %1558
    %v1561 = vlaneseq
    %v1562 = vshrl.u32 %v1561, 7
    %v1563 = vsub.s32 0, %v1562
    %v1564 = vrot.slane %v1553, %v1563
    %v1565 = vlaneseq
    %v1566 = vshrl.u32 %v1565, 7
    %v1567 = vsub.s32 0, %v1566
    %v1568 = vrot.slane %v1554, %v1567
    %v1569 = vmul.f32 %v1559, %v1564
    %v1570 = vmul.f32 %v1559, %v1568
    %v1571 = vadd.f32 %v1540, %v1569
    %v1572 = vadd.f32 %v1541, %v1570
    %v1573 = vld [vmem:[%s394] sm:$0xff]
    %1575 = vset.pattern.permute.xlu0 0
    %1576 = vperm.xlu0 %1575, %v1573
    %v1577 = vpop.permute.xlu0 %1576
    %v1579 = vlaneseq
    %v1580 = vshrl.u32 %v1579, 7
    %v1581 = vsub.s32 1, %v1580
    %v1582 = vrot.slane %v1553, %v1581
    %v1583 = vlaneseq
    %v1584 = vshrl.u32 %v1583, 7
    %v1585 = vsub.s32 1, %v1584
    %v1586 = vrot.slane %v1554, %v1585
    %v1587 = vmul.f32 %v1577, %v1582
    %v1588 = vmul.f32 %v1577, %v1586
    %v1589 = vadd.f32 %v1571, %v1587
    %v1590 = vadd.f32 %v1572, %v1588
    %v1591 = vld [vmem:[%s413] sm:$0xff]
    %1593 = vset.pattern.permute.xlu0 0
    %1594 = vperm.xlu0 %1593, %v1591
    %v1595 = vpop.permute.xlu0 %1594
    %v1597 = vlaneseq
    %v1598 = vshrl.u32 %v1597, 7
    %v1599 = vsub.s32 2, %v1598
    %v1600 = vrot.slane %v1553, %v1599
    %v1601 = vlaneseq
    %v1602 = vshrl.u32 %v1601, 7
    %v1603 = vsub.s32 2, %v1602
    %v1604 = vrot.slane %v1554, %v1603
    %v1605 = vmul.f32 %v1595, %v1600
    %v1606 = vmul.f32 %v1595, %v1604
    %v1607 = vadd.f32 %v1589, %v1605
    %v1608 = vadd.f32 %v1590, %v1606
    %v1609 = vld [vmem:[%s432] sm:$0xff]
    %1611 = vset.pattern.permute.xlu0 0
    %1612 = vperm.xlu0 %1611, %v1609
    %v1613 = vpop.permute.xlu0 %1612
    %v1615 = vlaneseq
    %v1616 = vshrl.u32 %v1615, 7
    %v1617 = vsub.s32 3, %v1616
    %v1618 = vrot.slane %v1553, %v1617
    %v1619 = vlaneseq
    %v1620 = vshrl.u32 %v1619, 7
    %v1621 = vsub.s32 3, %v1620
    %v1622 = vrot.slane %v1554, %v1621
    %v1623 = vmul.f32 %v1613, %v1618
    %v1624 = vmul.f32 %v1613, %v1622
    %v1625 = vadd.f32 %v1607, %v1623
    %v1626 = vadd.f32 %v1608, %v1624
    %v1627 = vld [vmem:[%s1255] sm:$0xff]
    %v1628 = vld [vmem:[%s1255 + $0x8] sm:$0xf]
    %v1631 = vcombine.high %v1627, %v1627
    %1632 = vrot.lane.b32.xlu0 %v1627, 112
    %v1633 = vpop.permute.xlu0 %1632
    %1634 = vrot.lane.b32.xlu0 %v1631, 112
    %v1635 = vpop.permute.xlu0 %1634
    %1636 = vrot.lane.b32.xlu0 %v1628, 112
    %v1637 = vpop.permute.xlu0 %1636
    %v1638 = vsel %vm462, %v1633, %v1635
    %v1639 = vsel %vm462, %v1635, %v1637
    %v1642 = vsel %vm62, %v1638, 0.0
    %v1643 = vsel %vm63, %v1639, 0.0
    %v1644 = vld [vmem:[%s469] sm:$0xff]
    %1646 = vset.pattern.permute.xlu0 0
    %1647 = vperm.xlu0 %1646, %v1644
    %v1648 = vpop.permute.xlu0 %1647
    %v1650 = vlaneseq
    %v1651 = vshrl.u32 %v1650, 7
    %v1652 = vsub.s32 0, %v1651
    %v1653 = vrot.slane %v1642, %v1652
    %v1654 = vlaneseq
    %v1655 = vshrl.u32 %v1654, 7
    %v1656 = vsub.s32 0, %v1655
    %v1657 = vrot.slane %v1643, %v1656
    %v1658 = vmul.f32 %v1648, %v1653
    %v1659 = vmul.f32 %v1648, %v1657
    %v1660 = vadd.f32 %v1625, %v1658
    %v1661 = vadd.f32 %v1626, %v1659
    %v1662 = vld [vmem:[%s488] sm:$0xff]
    %1664 = vset.pattern.permute.xlu0 0
    %1665 = vperm.xlu0 %1664, %v1662
    %v1666 = vpop.permute.xlu0 %1665
    %v1668 = vlaneseq
    %v1669 = vshrl.u32 %v1668, 7
    %v1670 = vsub.s32 1, %v1669
    %v1671 = vrot.slane %v1642, %v1670
    %v1672 = vlaneseq
    %v1673 = vshrl.u32 %v1672, 7
    %v1674 = vsub.s32 1, %v1673
    %v1675 = vrot.slane %v1643, %v1674
    %v1676 = vmul.f32 %v1666, %v1671
    %v1677 = vmul.f32 %v1666, %v1675
    %v1678 = vadd.f32 %v1660, %v1676
    %v1679 = vadd.f32 %v1661, %v1677
    %v1680 = vld [vmem:[%s507] sm:$0xff]
    %1682 = vset.pattern.permute.xlu0 0
    %1683 = vperm.xlu0 %1682, %v1680
    %v1684 = vpop.permute.xlu0 %1683
    %v1686 = vlaneseq
    %v1687 = vshrl.u32 %v1686, 7
    %v1688 = vsub.s32 2, %v1687
    %v1689 = vrot.slane %v1642, %v1688
    %v1690 = vlaneseq
    %v1691 = vshrl.u32 %v1690, 7
    %v1692 = vsub.s32 2, %v1691
    %v1693 = vrot.slane %v1643, %v1692
    %v1694 = vmul.f32 %v1684, %v1689
    %v1695 = vmul.f32 %v1684, %v1693
    %v1696 = vadd.f32 %v1678, %v1694
    %v1697 = vadd.f32 %v1679, %v1695
    %v1698 = vld [vmem:[%s526] sm:$0xff]
    %1700 = vset.pattern.permute.xlu0 0
    %1701 = vperm.xlu0 %1700, %v1698
    %v1702 = vpop.permute.xlu0 %1701
    %v1704 = vlaneseq
    %v1705 = vshrl.u32 %v1704, 7
    %v1706 = vsub.s32 3, %v1705
    %v1707 = vrot.slane %v1642, %v1706
    %v1708 = vlaneseq
    %v1709 = vshrl.u32 %v1708, 7
    %v1710 = vsub.s32 3, %v1709
    %v1711 = vrot.slane %v1643, %v1710
    %v1712 = vmul.f32 %v1702, %v1707
    %v1713 = vmul.f32 %v1702, %v1711
    %v1714 = vadd.f32 %v1696, %v1712
    %v1715 = vadd.f32 %v1697, %v1713
    %v1716 = vld [vmem:[%s1255] sm:$0xff]
    %v1717 = vld [vmem:[%s1255 + $0x8] sm:$0xf]
    %v1718 = vld [vmem:[%s547] sm:$0xff]
    %1720 = vset.pattern.permute.xlu0 0
    %1721 = vperm.xlu0 %1720, %v1718
    %v1722 = vpop.permute.xlu0 %1721
    %v1726 = vlaneseq
    %v1727 = vshrl.u32 %v1726, 7
    %v1728 = vsub.s32 0, %v1727
    %v1729 = vrot.slane %v1716, %v1728
    %v1730 = vlaneseq
    %v1731 = vshrl.u32 %v1730, 7
    %v1732 = vsub.s32 4, %v1731
    %v1733 = vrot.slane %v1716, %v1732
    %v1734 = vlaneseq
    %v1735 = vshrl.u32 %v1734, 7
    %v1736 = vsub.s32 0, %v1735
    %v1737 = vrot.slane %v1717, %v1736
    %v1741 = vlaneseq
    %v1742 = vshrl.u32 %v1741, 7
    %v1743 = vsub.s32 0, %v1742
    %v1744 = vrot.slane %v1729, %v1743
    %v1745 = vlaneseq
    %v1746 = vshrl.u32 %v1745, 7
    %v1747 = vsub.s32 0, %v1746
    %v1748 = vrot.slane %v1733, %v1747
    %v1749 = vlaneseq
    %v1750 = vshrl.u32 %v1749, 7
    %v1751 = vsub.s32 0, %v1750
    %v1752 = vrot.slane %v1737, %v1751
    %v1753 = vmul.f32 %v1722, %v1744
    %v1754 = vmul.f32 %v1722, %v1748
    %v1755 = vmul.f32 %v1722, %v1752
    %1759 = vrot.lane.b32.xlu0 %v1753, 111
    %v1760 = vpop.permute.xlu0 %1759
    %1761 = vrot.lane.b32.xlu0 %v1754, 111
    %v1762 = vpop.permute.xlu0 %1761
    %1763 = vrot.lane.b32.xlu0 %v1755, 111
    %v1764 = vpop.permute.xlu0 %1763
    %v1765 = vsel %vm595, %v1760, %v1762
    %v1766 = vsel %vm595, %v1762, %v1764
    %v1769 = vadd.f32 %v1714, %v1765
    %v1770 = vadd.f32 %v1715, %v1766
    %v1771 = vld [vmem:[%s602] sm:$0xff]
    %1773 = vset.pattern.permute.xlu0 0
    %1774 = vperm.xlu0 %1773, %v1771
    %v1775 = vpop.permute.xlu0 %1774
    %v1777 = vlaneseq
    %v1778 = vshrl.u32 %v1777, 7
    %v1779 = vsub.s32 1, %v1778
    %v1780 = vrot.slane %v1716, %v1779
    %v1781 = vlaneseq
    %v1782 = vshrl.u32 %v1781, 7
    %v1783 = vsub.s32 5, %v1782
    %v1784 = vrot.slane %v1716, %v1783
    %v1785 = vlaneseq
    %v1786 = vshrl.u32 %v1785, 7
    %v1787 = vsub.s32 1, %v1786
    %v1788 = vrot.slane %v1717, %v1787
    %v1792 = vlaneseq
    %v1793 = vshrl.u32 %v1792, 7
    %v1794 = vsub.s32 1, %v1793
    %v1795 = vrot.slane %v1780, %v1794
    %v1796 = vlaneseq
    %v1797 = vshrl.u32 %v1796, 7
    %v1798 = vsub.s32 1, %v1797
    %v1799 = vrot.slane %v1784, %v1798
    %v1800 = vlaneseq
    %v1801 = vshrl.u32 %v1800, 7
    %v1802 = vsub.s32 1, %v1801
    %v1803 = vrot.slane %v1788, %v1802
    %v1804 = vmul.f32 %v1775, %v1795
    %v1805 = vmul.f32 %v1775, %v1799
    %v1806 = vmul.f32 %v1775, %v1803
    %1810 = vrot.lane.b32.xlu0 %v1804, 111
    %v1811 = vpop.permute.xlu0 %1810
    %1812 = vrot.lane.b32.xlu0 %v1805, 111
    %v1813 = vpop.permute.xlu0 %1812
    %1814 = vrot.lane.b32.xlu0 %v1806, 111
    %v1815 = vpop.permute.xlu0 %1814
    %v1816 = vsel %vm595, %v1811, %v1813
    %v1817 = vsel %vm595, %v1813, %v1815
    %v1820 = vadd.f32 %v1769, %v1816
    %v1821 = vadd.f32 %v1770, %v1817
    %v1822 = vld [vmem:[%s654] sm:$0xff]
    %1824 = vset.pattern.permute.xlu0 0
    %1825 = vperm.xlu0 %1824, %v1822
    %v1826 = vpop.permute.xlu0 %1825
    %v1828 = vlaneseq
    %v1829 = vshrl.u32 %v1828, 7
    %v1830 = vsub.s32 2, %v1829
    %v1831 = vrot.slane %v1716, %v1830
    %v1832 = vlaneseq
    %v1833 = vshrl.u32 %v1832, 7
    %v1834 = vsub.s32 6, %v1833
    %v1835 = vrot.slane %v1716, %v1834
    %v1836 = vlaneseq
    %v1837 = vshrl.u32 %v1836, 7
    %v1838 = vsub.s32 2, %v1837
    %v1839 = vrot.slane %v1717, %v1838
    %v1843 = vlaneseq
    %v1844 = vshrl.u32 %v1843, 7
    %v1845 = vsub.s32 2, %v1844
    %v1846 = vrot.slane %v1831, %v1845
    %v1847 = vlaneseq
    %v1848 = vshrl.u32 %v1847, 7
    %v1849 = vsub.s32 2, %v1848
    %v1850 = vrot.slane %v1835, %v1849
    %v1851 = vlaneseq
    %v1852 = vshrl.u32 %v1851, 7
    %v1853 = vsub.s32 2, %v1852
    %v1854 = vrot.slane %v1839, %v1853
    %v1855 = vmul.f32 %v1826, %v1846
    %v1856 = vmul.f32 %v1826, %v1850
    %v1857 = vmul.f32 %v1826, %v1854
    %1861 = vrot.lane.b32.xlu0 %v1855, 111
    %v1862 = vpop.permute.xlu0 %1861
    %1863 = vrot.lane.b32.xlu0 %v1856, 111
    %v1864 = vpop.permute.xlu0 %1863
    %1865 = vrot.lane.b32.xlu0 %v1857, 111
    %v1866 = vpop.permute.xlu0 %1865
    %v1867 = vsel %vm595, %v1862, %v1864
    %v1868 = vsel %vm595, %v1864, %v1866
    %v1871 = vadd.f32 %v1820, %v1867
    %v1872 = vadd.f32 %v1821, %v1868
    %v1873 = vld [vmem:[%s706] sm:$0xff]
    %1875 = vset.pattern.permute.xlu0 0
    %1876 = vperm.xlu0 %1875, %v1873
    %v1877 = vpop.permute.xlu0 %1876
    %v1879 = vlaneseq
    %v1880 = vshrl.u32 %v1879, 7
    %v1881 = vsub.s32 3, %v1880
    %v1882 = vrot.slane %v1716, %v1881
    %v1883 = vlaneseq
    %v1884 = vshrl.u32 %v1883, 7
    %v1885 = vsub.s32 7, %v1884
    %v1886 = vrot.slane %v1716, %v1885
    %v1887 = vlaneseq
    %v1888 = vshrl.u32 %v1887, 7
    %v1889 = vsub.s32 3, %v1888
    %v1890 = vrot.slane %v1717, %v1889
    %v1894 = vlaneseq
    %v1895 = vshrl.u32 %v1894, 7
    %v1896 = vsub.s32 3, %v1895
    %v1897 = vrot.slane %v1882, %v1896
    %v1898 = vlaneseq
    %v1899 = vshrl.u32 %v1898, 7
    %v1900 = vsub.s32 3, %v1899
    %v1901 = vrot.slane %v1886, %v1900
    %v1902 = vlaneseq
    %v1903 = vshrl.u32 %v1902, 7
    %v1904 = vsub.s32 3, %v1903
    %v1905 = vrot.slane %v1890, %v1904
    %v1906 = vmul.f32 %v1877, %v1897
    %v1907 = vmul.f32 %v1877, %v1901
    %v1908 = vmul.f32 %v1877, %v1905
    %1912 = vrot.lane.b32.xlu0 %v1906, 111
    %v1913 = vpop.permute.xlu0 %1912
    %1914 = vrot.lane.b32.xlu0 %v1907, 111
    %v1915 = vpop.permute.xlu0 %1914
    %1916 = vrot.lane.b32.xlu0 %v1908, 111
    %v1917 = vpop.permute.xlu0 %1916
    %v1918 = vsel %vm595, %v1913, %v1915
    %v1919 = vsel %vm595, %v1915, %v1917
    %v1922 = vadd.f32 %v1871, %v1918
    %v1923 = vadd.f32 %v1872, %v1919
    %v1924 = vcombine.high %v1716, %v1716
    %1925 = vrot.lane.b32.xlu0 %v1716, 110
    %v1926 = vpop.permute.xlu0 %1925
    %1927 = vrot.lane.b32.xlu0 %v1924, 110
    %v1928 = vpop.permute.xlu0 %1927
    %1929 = vrot.lane.b32.xlu0 %v1717, 110
    %v1930 = vpop.permute.xlu0 %1929
    %v1931 = vsel %vm765, %v1926, %v1928
    %v1932 = vsel %vm765, %v1928, %v1930
    %v1935 = vsel %vm359, %v1931, 0.0
    %v1936 = vsel %vm360, %v1932, 0.0
    %v1937 = vld [vmem:[%s772] sm:$0xff]
    %1939 = vset.pattern.permute.xlu0 0
    %1940 = vperm.xlu0 %1939, %v1937
    %v1941 = vpop.permute.xlu0 %1940
    %v1943 = vlaneseq
    %v1944 = vshrl.u32 %v1943, 7
    %v1945 = vsub.s32 0, %v1944
    %v1946 = vrot.slane %v1935, %v1945
    %v1947 = vlaneseq
    %v1948 = vshrl.u32 %v1947, 7
    %v1949 = vsub.s32 0, %v1948
    %v1950 = vrot.slane %v1936, %v1949
    %v1951 = vmul.f32 %v1941, %v1946
    %v1952 = vmul.f32 %v1941, %v1950
    %v1953 = vadd.f32 %v1922, %v1951
    %v1954 = vadd.f32 %v1923, %v1952
    %v1955 = vld [vmem:[%s791] sm:$0xff]
    %1957 = vset.pattern.permute.xlu0 0
    %1958 = vperm.xlu0 %1957, %v1955
    %v1959 = vpop.permute.xlu0 %1958
    %v1961 = vlaneseq
    %v1962 = vshrl.u32 %v1961, 7
    %v1963 = vsub.s32 1, %v1962
    %v1964 = vrot.slane %v1935, %v1963
    %v1965 = vlaneseq
    %v1966 = vshrl.u32 %v1965, 7
    %v1967 = vsub.s32 1, %v1966
    %v1968 = vrot.slane %v1936, %v1967
    %v1969 = vmul.f32 %v1959, %v1964
    %v1970 = vmul.f32 %v1959, %v1968
    %v1971 = vadd.f32 %v1953, %v1969
    %v1972 = vadd.f32 %v1954, %v1970
    %v1973 = vld [vmem:[%s810] sm:$0xff]
    %1975 = vset.pattern.permute.xlu0 0
    %1976 = vperm.xlu0 %1975, %v1973
    %v1977 = vpop.permute.xlu0 %1976
    %v1979 = vlaneseq
    %v1980 = vshrl.u32 %v1979, 7
    %v1981 = vsub.s32 2, %v1980
    %v1982 = vrot.slane %v1935, %v1981
    %v1983 = vlaneseq
    %v1984 = vshrl.u32 %v1983, 7
    %v1985 = vsub.s32 2, %v1984
    %v1986 = vrot.slane %v1936, %v1985
    %v1987 = vmul.f32 %v1977, %v1982
    %v1988 = vmul.f32 %v1977, %v1986
    %v1989 = vadd.f32 %v1971, %v1987
    %v1990 = vadd.f32 %v1972, %v1988
    %v1991 = vld [vmem:[%s829] sm:$0xff]
    %1993 = vset.pattern.permute.xlu0 0
    %1994 = vperm.xlu0 %1993, %v1991
    %v1995 = vpop.permute.xlu0 %1994
    %v1997 = vlaneseq
    %v1998 = vshrl.u32 %v1997, 7
    %v1999 = vsub.s32 3, %v1998
    %v2000 = vrot.slane %v1935, %v1999
    %v2001 = vlaneseq
    %v2002 = vshrl.u32 %v2001, 7
    %v2003 = vsub.s32 3, %v2002
    %v2004 = vrot.slane %v1936, %v2003
    %v2005 = vmul.f32 %v1995, %v2000
    %v2006 = vmul.f32 %v1995, %v2004
    %v2007 = vadd.f32 %v1989, %v2005
    %v2008 = vadd.f32 %v1990, %v2006
    %v2009 = vld [vmem:[%s1255] sm:$0xff]
    %v2010 = vld [vmem:[%s1255 + $0x8] sm:$0xf]
    %v2013 = vcombine.high %v2009, %v2009
    %2014 = vrot.lane.b32.xlu0 %v2009, 96
    %v2015 = vpop.permute.xlu0 %2014
    %2016 = vrot.lane.b32.xlu0 %v2013, 96
    %v2017 = vpop.permute.xlu0 %2016
    %2018 = vrot.lane.b32.xlu0 %v2010, 96
    %v2019 = vpop.permute.xlu0 %2018
    %v2020 = vsel %vm859, %v2015, %v2017
    %v2021 = vsel %vm859, %v2017, %v2019
    %v2024 = vsel %vm62, %v2020, 0.0
    %v2025 = vsel %vm63, %v2021, 0.0
    %v2026 = vld [vmem:[%s866] sm:$0xff]
    %2028 = vset.pattern.permute.xlu0 0
    %2029 = vperm.xlu0 %2028, %v2026
    %v2030 = vpop.permute.xlu0 %2029
    %v2032 = vlaneseq
    %v2033 = vshrl.u32 %v2032, 7
    %v2034 = vsub.s32 0, %v2033
    %v2035 = vrot.slane %v2024, %v2034
    %v2036 = vlaneseq
    %v2037 = vshrl.u32 %v2036, 7
    %v2038 = vsub.s32 0, %v2037
    %v2039 = vrot.slane %v2025, %v2038
    %v2040 = vmul.f32 %v2030, %v2035
    %v2041 = vmul.f32 %v2030, %v2039
    %v2042 = vadd.f32 %v2007, %v2040
    %v2043 = vadd.f32 %v2008, %v2041
    %v2044 = vld [vmem:[%s885] sm:$0xff]
    %2046 = vset.pattern.permute.xlu0 0
    %2047 = vperm.xlu0 %2046, %v2044
    %v2048 = vpop.permute.xlu0 %2047
    %v2050 = vlaneseq
    %v2051 = vshrl.u32 %v2050, 7
    %v2052 = vsub.s32 1, %v2051
    %v2053 = vrot.slane %v2024, %v2052
    %v2054 = vlaneseq
    %v2055 = vshrl.u32 %v2054, 7
    %v2056 = vsub.s32 1, %v2055
    %v2057 = vrot.slane %v2025, %v2056
    %v2058 = vmul.f32 %v2048, %v2053
    %v2059 = vmul.f32 %v2048, %v2057
    %v2060 = vadd.f32 %v2042, %v2058
    %v2061 = vadd.f32 %v2043, %v2059
    %v2062 = vld [vmem:[%s904] sm:$0xff]
    %2064 = vset.pattern.permute.xlu0 0
    %2065 = vperm.xlu0 %2064, %v2062
    %v2066 = vpop.permute.xlu0 %2065
    %v2068 = vlaneseq
    %v2069 = vshrl.u32 %v2068, 7
    %v2070 = vsub.s32 2, %v2069
    %v2071 = vrot.slane %v2024, %v2070
    %v2072 = vlaneseq
    %v2073 = vshrl.u32 %v2072, 7
    %v2074 = vsub.s32 2, %v2073
    %v2075 = vrot.slane %v2025, %v2074
    %v2076 = vmul.f32 %v2066, %v2071
    %v2077 = vmul.f32 %v2066, %v2075
    %v2078 = vadd.f32 %v2060, %v2076
    %v2079 = vadd.f32 %v2061, %v2077
    %v2080 = vld [vmem:[%s923] sm:$0xff]
    %2082 = vset.pattern.permute.xlu0 0
    %2083 = vperm.xlu0 %2082, %v2080
    %v2084 = vpop.permute.xlu0 %2083
    %v2086 = vlaneseq
    %v2087 = vshrl.u32 %v2086, 7
    %v2088 = vsub.s32 3, %v2087
    %v2089 = vrot.slane %v2024, %v2088
    %v2090 = vlaneseq
    %v2091 = vshrl.u32 %v2090, 7
    %v2092 = vsub.s32 3, %v2091
    %v2093 = vrot.slane %v2025, %v2092
    %v2094 = vmul.f32 %v2084, %v2089
    %v2095 = vmul.f32 %v2084, %v2093
    %v2096 = vadd.f32 %v2078, %v2094
    %v2097 = vadd.f32 %v2079, %v2095
    %v2098 = vld [vmem:[%s1255] sm:$0xff]
    %v2099 = vld [vmem:[%s1255 + $0x8] sm:$0xf]
    %v2100 = vld [vmem:[%s944] sm:$0xff]
    %2102 = vset.pattern.permute.xlu0 0
    %2103 = vperm.xlu0 %2102, %v2100
    %v2104 = vpop.permute.xlu0 %2103
    %v2108 = vlaneseq
    %v2109 = vshrl.u32 %v2108, 7
    %v2110 = vsub.s32 0, %v2109
    %v2111 = vrot.slane %v2098, %v2110
    %v2112 = vlaneseq
    %v2113 = vshrl.u32 %v2112, 7
    %v2114 = vsub.s32 4, %v2113
    %v2115 = vrot.slane %v2098, %v2114
    %v2116 = vlaneseq
    %v2117 = vshrl.u32 %v2116, 7
    %v2118 = vsub.s32 0, %v2117
    %v2119 = vrot.slane %v2099, %v2118
    %v2123 = vlaneseq
    %v2124 = vshrl.u32 %v2123, 7
    %v2125 = vsub.s32 0, %v2124
    %v2126 = vrot.slane %v2111, %v2125
    %v2127 = vlaneseq
    %v2128 = vshrl.u32 %v2127, 7
    %v2129 = vsub.s32 0, %v2128
    %v2130 = vrot.slane %v2115, %v2129
    %v2131 = vlaneseq
    %v2132 = vshrl.u32 %v2131, 7
    %v2133 = vsub.s32 0, %v2132
    %v2134 = vrot.slane %v2119, %v2133
    %v2135 = vmul.f32 %v2104, %v2126
    %v2136 = vmul.f32 %v2104, %v2130
    %v2137 = vmul.f32 %v2104, %v2134
    %2141 = vrot.lane.b32.xlu0 %v2135, 95
    %v2142 = vpop.permute.xlu0 %2141
    %2143 = vrot.lane.b32.xlu0 %v2136, 95
    %v2144 = vpop.permute.xlu0 %2143
    %2145 = vrot.lane.b32.xlu0 %v2137, 95
    %v2146 = vpop.permute.xlu0 %2145
    %v2147 = vsel %vm992, %v2142, %v2144
    %v2148 = vsel %vm992, %v2144, %v2146
    %v2151 = vadd.f32 %v2096, %v2147
    %v2152 = vadd.f32 %v2097, %v2148
    %v2153 = vld [vmem:[%s999] sm:$0xff]
    %2155 = vset.pattern.permute.xlu0 0
    %2156 = vperm.xlu0 %2155, %v2153
    %v2157 = vpop.permute.xlu0 %2156
    %v2159 = vlaneseq
    %v2160 = vshrl.u32 %v2159, 7
    %v2161 = vsub.s32 1, %v2160
    %v2162 = vrot.slane %v2098, %v2161
    %v2163 = vlaneseq
    %v2164 = vshrl.u32 %v2163, 7
    %v2165 = vsub.s32 5, %v2164
    %v2166 = vrot.slane %v2098, %v2165
    %v2167 = vlaneseq
    %v2168 = vshrl.u32 %v2167, 7
    %v2169 = vsub.s32 1, %v2168
    %v2170 = vrot.slane %v2099, %v2169
    %v2174 = vlaneseq
    %v2175 = vshrl.u32 %v2174, 7
    %v2176 = vsub.s32 1, %v2175
    %v2177 = vrot.slane %v2162, %v2176
    %v2178 = vlaneseq
    %v2179 = vshrl.u32 %v2178, 7
    %v2180 = vsub.s32 1, %v2179
    %v2181 = vrot.slane %v2166, %v2180
    %v2182 = vlaneseq
    %v2183 = vshrl.u32 %v2182, 7
    %v2184 = vsub.s32 1, %v2183
    %v2185 = vrot.slane %v2170, %v2184
    %v2186 = vmul.f32 %v2157, %v2177
    %v2187 = vmul.f32 %v2157, %v2181
    %v2188 = vmul.f32 %v2157, %v2185
    %2192 = vrot.lane.b32.xlu0 %v2186, 95
    %v2193 = vpop.permute.xlu0 %2192
    %2194 = vrot.lane.b32.xlu0 %v2187, 95
    %v2195 = vpop.permute.xlu0 %2194
    %2196 = vrot.lane.b32.xlu0 %v2188, 95
    %v2197 = vpop.permute.xlu0 %2196
    %v2198 = vsel %vm992, %v2193, %v2195
    %v2199 = vsel %vm992, %v2195, %v2197
    %v2202 = vadd.f32 %v2151, %v2198
    %v2203 = vadd.f32 %v2152, %v2199
    %v2204 = vld [vmem:[%s1051] sm:$0xff]
    %2206 = vset.pattern.permute.xlu0 0
    %2207 = vperm.xlu0 %2206, %v2204
    %v2208 = vpop.permute.xlu0 %2207
    %v2210 = vlaneseq
    %v2211 = vshrl.u32 %v2210, 7
    %v2212 = vsub.s32 2, %v2211
    %v2213 = vrot.slane %v2098, %v2212
    %v2214 = vlaneseq
    %v2215 = vshrl.u32 %v2214, 7
    %v2216 = vsub.s32 6, %v2215
    %v2217 = vrot.slane %v2098, %v2216
    %v2218 = vlaneseq
    %v2219 = vshrl.u32 %v2218, 7
    %v2220 = vsub.s32 2, %v2219
    %v2221 = vrot.slane %v2099, %v2220
    %v2225 = vlaneseq
    %v2226 = vshrl.u32 %v2225, 7
    %v2227 = vsub.s32 2, %v2226
    %v2228 = vrot.slane %v2213, %v2227
    %v2229 = vlaneseq
    %v2230 = vshrl.u32 %v2229, 7
    %v2231 = vsub.s32 2, %v2230
    %v2232 = vrot.slane %v2217, %v2231
    %v2233 = vlaneseq
    %v2234 = vshrl.u32 %v2233, 7
    %v2235 = vsub.s32 2, %v2234
    %v2236 = vrot.slane %v2221, %v2235
    %v2237 = vmul.f32 %v2208, %v2228
    %v2238 = vmul.f32 %v2208, %v2232
    %v2239 = vmul.f32 %v2208, %v2236
    %2243 = vrot.lane.b32.xlu0 %v2237, 95
    %v2244 = vpop.permute.xlu0 %2243
    %2245 = vrot.lane.b32.xlu0 %v2238, 95
    %v2246 = vpop.permute.xlu0 %2245
    %2247 = vrot.lane.b32.xlu0 %v2239, 95
    %v2248 = vpop.permute.xlu0 %2247
    %v2249 = vsel %vm992, %v2244, %v2246
    %v2250 = vsel %vm992, %v2246, %v2248
    %v2253 = vadd.f32 %v2202, %v2249
    %v2254 = vadd.f32 %v2203, %v2250
    %v2255 = vld [vmem:[%s1103] sm:$0xff]
    %2257 = vset.pattern.permute.xlu0 0
    %2258 = vperm.xlu0 %2257, %v2255
    %v2259 = vpop.permute.xlu0 %2258
    %v2261 = vlaneseq
    %v2262 = vshrl.u32 %v2261, 7
    %v2263 = vsub.s32 3, %v2262
    %v2264 = vrot.slane %v2098, %v2263
    %v2265 = vlaneseq
    %v2266 = vshrl.u32 %v2265, 7
    %v2267 = vsub.s32 7, %v2266
    %v2268 = vrot.slane %v2098, %v2267
    %v2269 = vlaneseq
    %v2270 = vshrl.u32 %v2269, 7
    %v2271 = vsub.s32 3, %v2270
    %v2272 = vrot.slane %v2099, %v2271
    %v2276 = vlaneseq
    %v2277 = vshrl.u32 %v2276, 7
    %v2278 = vsub.s32 3, %v2277
    %v2279 = vrot.slane %v2264, %v2278
    %v2280 = vlaneseq
    %v2281 = vshrl.u32 %v2280, 7
    %v2282 = vsub.s32 3, %v2281
    %v2283 = vrot.slane %v2268, %v2282
    %v2284 = vlaneseq
    %v2285 = vshrl.u32 %v2284, 7
    %v2286 = vsub.s32 3, %v2285
    %v2287 = vrot.slane %v2272, %v2286
    %v2288 = vmul.f32 %v2259, %v2279
    %v2289 = vmul.f32 %v2259, %v2283
    %v2290 = vmul.f32 %v2259, %v2287
    %2294 = vrot.lane.b32.xlu0 %v2288, 95
    %v2295 = vpop.permute.xlu0 %2294
    %2296 = vrot.lane.b32.xlu0 %v2289, 95
    %v2297 = vpop.permute.xlu0 %2296
    %2298 = vrot.lane.b32.xlu0 %v2290, 95
    %v2299 = vpop.permute.xlu0 %2298
    %v2300 = vsel %vm992, %v2295, %v2297
    %v2301 = vsel %vm992, %v2297, %v2299
    %v2304 = vadd.f32 %v2253, %v2300
    %v2305 = vadd.f32 %v2254, %v2301
    %v2306 = vcombine.high %v2098, %v2098
    %2307 = vrot.lane.b32.xlu0 %v2098, 94
    %v2308 = vpop.permute.xlu0 %2307
    %2309 = vrot.lane.b32.xlu0 %v2306, 94
    %v2310 = vpop.permute.xlu0 %2309
    %2311 = vrot.lane.b32.xlu0 %v2099, 94
    %v2312 = vpop.permute.xlu0 %2311
    %v2313 = vsel %vm1162, %v2308, %v2310
    %v2314 = vsel %vm1162, %v2310, %v2312
    %v2317 = vsel %vm359, %v2313, 0.0
    %v2318 = vsel %vm360, %v2314, 0.0
    %v2319 = vld [vmem:[%s1169] sm:$0xff]
    %2321 = vset.pattern.permute.xlu0 0
    %2322 = vperm.xlu0 %2321, %v2319
    %v2323 = vpop.permute.xlu0 %2322
    %v2325 = vlaneseq
    %v2326 = vshrl.u32 %v2325, 7
    %v2327 = vsub.s32 0, %v2326
    %v2328 = vrot.slane %v2317, %v2327
    %v2329 = vlaneseq
    %v2330 = vshrl.u32 %v2329, 7
    %v2331 = vsub.s32 0, %v2330
    %v2332 = vrot.slane %v2318, %v2331
    %v2333 = vmul.f32 %v2323, %v2328
    %v2334 = vmul.f32 %v2323, %v2332
    %v2335 = vadd.f32 %v2304, %v2333
    %v2336 = vadd.f32 %v2305, %v2334
    %v2337 = vld [vmem:[%s1188] sm:$0xff]
    %2339 = vset.pattern.permute.xlu0 0
    %2340 = vperm.xlu0 %2339, %v2337
    %v2341 = vpop.permute.xlu0 %2340
    %v2343 = vlaneseq
    %v2344 = vshrl.u32 %v2343, 7
    %v2345 = vsub.s32 1, %v2344
    %v2346 = vrot.slane %v2317, %v2345
    %v2347 = vlaneseq
    %v2348 = vshrl.u32 %v2347, 7
    %v2349 = vsub.s32 1, %v2348
    %v2350 = vrot.slane %v2318, %v2349
    %v2351 = vmul.f32 %v2341, %v2346
    %v2352 = vmul.f32 %v2341, %v2350
    %v2353 = vadd.f32 %v2335, %v2351
    %v2354 = vadd.f32 %v2336, %v2352
    %v2355 = vld [vmem:[%s1207] sm:$0xff]
    %2357 = vset.pattern.permute.xlu0 0
    %2358 = vperm.xlu0 %2357, %v2355
    %v2359 = vpop.permute.xlu0 %2358
    %v2361 = vlaneseq
    %v2362 = vshrl.u32 %v2361, 7
    %v2363 = vsub.s32 2, %v2362
    %v2364 = vrot.slane %v2317, %v2363
    %v2365 = vlaneseq
    %v2366 = vshrl.u32 %v2365, 7
    %v2367 = vsub.s32 2, %v2366
    %v2368 = vrot.slane %v2318, %v2367
    %v2369 = vmul.f32 %v2359, %v2364
    %v2370 = vmul.f32 %v2359, %v2368
    %v2371 = vadd.f32 %v2353, %v2369
    %v2372 = vadd.f32 %v2354, %v2370
    %v2373 = vld [vmem:[%s1226] sm:$0xff]
    %2375 = vset.pattern.permute.xlu0 0
    %2376 = vperm.xlu0 %2375, %v2373
    %v2377 = vpop.permute.xlu0 %2376
    %v2379 = vlaneseq
    %v2380 = vshrl.u32 %v2379, 7
    %v2381 = vsub.s32 3, %v2380
    %v2382 = vrot.slane %v2317, %v2381
    %v2383 = vlaneseq
    %v2384 = vshrl.u32 %v2383, 7
    %v2385 = vsub.s32 3, %v2384
    %v2386 = vrot.slane %v2318, %v2385
    %v2387 = vmul.f32 %v2377, %v2382
    %v2388 = vmul.f32 %v2377, %v2386
    %v2389 = vadd.f32 %v2371, %v2387
    %v2390 = vadd.f32 %v2372, %v2388
    %v2391 = vld [vmem:[%s2] sm:$0xff]
    %2393 = vset.pattern.permute.xlu0 0
    %2394 = vperm.xlu0 %2393, %v2391
    %v2395 = vpop.permute.xlu0 %2394
    %v2397 = vadd.f32 %v2389, %v2395
    %v2398 = vadd.f32 %v2390, %v2395
    %s2399 = scalar_lea.vmem %s3, 16
    %2400 = vst [vmem:[%s2399] sm:$0xff] %v2397
    %2401 = vst [vmem:[%s2399 + $0x8] sm:$0xff] %v2398
    // Predicated region
    $region18: #{_lambda_.1} parent=1 // pred_check
      _
    $region19: #{_lambda_.1} parent=1 // pred_check_branch
      %2403 = sbr.rel (0) target = $region21
    $region20: #{_lambda_.1} parent=1 // pred_region
      _
    $region21: #{_lambda_.1} parent=1 // pred_fallthru
      _
    // Predicated region
    $region22: #{_lambda_.1} parent=1 // pred_check
      _
    $region23: #{_lambda_.1} parent=1 // pred_check_branch
      %2405 = sbr.rel (0) target = $region25
    $region24: #{_lambda_.1} parent=1 // pred_region
      _
    $region25: #{_lambda_.1} parent=1 // pred_fallthru
      _
    %2406 = vsyncpa [#allocation3], 1

</llo_original>
